<compile_context>
chip_gen: v7x
topology: tpu7x:2x2x1
jax: 0.10.0
libtpu: 0.0.40
codegen_flags: <defaults>
</compile_context>

<pallas_src>
import jax
import jax.numpy as jnp
import numpy as np
from jax.experimental import pallas as pl
from jax.experimental.pallas import tpu as pltpu


def _conv3x3(x_f32, wg_ref, b_ref):
    """3x3 'same' convolution (stride 1) + per-channel bias.

    x_f32 : (H, W, C) float32 activations (value, already in VMEM/vregs).
    wg_ref: (3, 3*C, C) bf16 ref with wg_ref[kh][kw*C + ci, co]
            = scale[co] * W[kh, kw, ci, co]  (HWIO, BN scale folded).
    b_ref : (1, C) float32 ref (folded BN bias).
    Returns (H*W, C) float32.
    """
    H, W, C = x_f32.shape

    # Width shifts built with zero-fill (the +/-1 kw taps of the conv).
    zcol = jnp.zeros((H, 1, C), jnp.float32)
    x_m1 = jnp.concatenate([zcol, x_f32[:, :W - 1, :]], axis=1)   # X[h, w-1]
    x_p1 = jnp.concatenate([x_f32[:, 1:, :], zcol], axis=1)       # X[h, w+1]

    # Group the 3 kw taps along the channel (lane) axis -> contraction K = 3C.
    # Cast to bf16 only at the MXU input; accumulation stays f32.
    cat = jnp.concatenate([x_m1, x_f32, x_p1], axis=-1).astype(jnp.bfloat16)

    # Height shifts are free leading-axis slices/concats (not the sublane dim).
    zrow = jnp.zeros((1, W, 3 * C), jnp.bfloat16)
    top = jnp.concatenate([zrow, cat[:H - 1]], axis=0)            # X[h-1, ..]
    bot = jnp.concatenate([cat[1:], zrow], axis=0)                # X[h+1, ..]

    acc = jnp.dot(top.reshape(H * W, 3 * C), wg_ref[0],
                  preferred_element_type=jnp.float32)
    acc = acc + jnp.dot(cat.reshape(H * W, 3 * C), wg_ref[1],
                        preferred_element_type=jnp.float32)
    acc = acc + jnp.dot(bot.reshape(H * W, 3 * C), wg_ref[2],
                        preferred_element_type=jnp.float32)
    return acc + b_ref[...]


def basic_block_kernel(x_ref, w1_ref, b1_ref, w2_ref, b2_ref, out_ref):
    """One image per grid step.

    x_ref  : (1, H, W, C) f32 input (also serves as the residual identity).
    w*_ref : (3, 3*C, C)  bf16 conv weights with BN scale folded in.
    b*_ref : (1, C)       f32 folded BN bias.
    out_ref: (1, H, W, C) output.
    """
    _, H, W, C = out_ref.shape
    x = x_ref[0].astype(jnp.float32)                   # (H, W, C), single read

    # conv1 + bn1(folded) + relu1
    h1 = jnp.maximum(_conv3x3(x, w1_ref, b1_ref), 0.0).reshape(H, W, C)

    # conv2 + bn2(folded) + residual add + relu2   (all f32 on the VPU)
    h2 = _conv3x3(h1, w2_ref, b2_ref).reshape(H, W, C)
    y = jnp.maximum(h2 + x, 0.0)
    out_ref[0] = y.astype(out_ref.dtype)


def _fold_bn_into_weights(w_oihw, gamma, beta, mean, var, eps):
    """Fold eval-mode BN into conv weights (scale) and a bias; regroup weights
    for the kw-grouped K=3C matmul layout."""
    scale = gamma / jnp.sqrt(var + eps)                       # (Cout,)
    bias = beta - mean * scale                                # (Cout,)
    w_hwio = jnp.transpose(w_oihw, (2, 3, 1, 0))              # (3, 3, Cin, Cout)
    w_scaled = w_hwio * scale[None, None, None, :]
    kh, kw, ci, co = w_scaled.shape
    w_grouped = w_scaled.reshape(kh, kw * ci, co).astype(jnp.bfloat16)
    return w_grouped, bias.reshape(1, co).astype(jnp.float32)


def basic_block_pallas(x_nchw, w1, g1, bt1, m1, v1, w2, g2, bt2, m2, v2,
                       eps=1e-5):
    """BasicBlock forward (stride=1, downsample=None) via Pallas."""
    x = jnp.transpose(x_nchw, (0, 2, 3, 1))                   # NCHW -> NHWC
    N, H, W, C = x.shape
    w1g, b1 = _fold_bn_into_weights(w1, g1, bt1, m1, v1, eps)
    w2g, b2 = _fold_bn_into_weights(w2, g2, bt2, m2, v2, eps)

    out_nhwc = pl.pallas_call(
        basic_block_kernel,
        out_shape=jax.ShapeDtypeStruct((N, H, W, C), x.dtype),
        grid_spec=pltpu.PrefetchScalarGridSpec(
            num_scalar_prefetch=0,
            grid=(N,),
            in_specs=[
                pl.BlockSpec((1, H, W, C), lambda n: (n, 0, 0, 0)),
                pl.BlockSpec((3, 3 * C, C), lambda n: (0, 0, 0)),
                pl.BlockSpec((1, C), lambda n: (0, 0)),
                pl.BlockSpec((3, 3 * C, C), lambda n: (0, 0, 0)),
                pl.BlockSpec((1, C), lambda n: (0, 0)),
            ],
            out_specs=pl.BlockSpec((1, H, W, C), lambda n: (n, 0, 0, 0)),
        ),
        compiler_params=pltpu.CompilerParams(
            dimension_semantics=("parallel",)),
    )(x, w1g, b1, w2g, b2)
    return jnp.transpose(out_nhwc, (0, 3, 1, 2))              # back to NCHW


def basic_block_ref(x_nchw, w1, g1, bt1, m1, v1, w2, g2, bt2, m2, v2,
                    eps=1e-5):
    """Pure-JAX f32 reference (eval-mode BN), NCHW like PyTorch."""
    def conv(x, w):
        return jax.lax.conv_general_dilated(
            x, w, window_strides=(1, 1), padding=((1, 1), (1, 1)),
            dimension_numbers=("NCHW", "OIHW", "NCHW"))

    def bn(x, g, b, m, v):
        g = g[None, :, None, None]; b = b[None, :, None, None]
        m = m[None, :, None, None]; v = v[None, :, None, None]
        return (x - m) / jnp.sqrt(v + eps) * g + b

    o = jnp.maximum(bn(conv(x_nchw, w1), g1, bt1, m1, v1), 0.0)
    o = bn(conv(o, w2), g2, bt2, m2, v2)
    return jnp.maximum(o + x_nchw, 0.0)


if __name__ == "__main__":
    # Small shapes: batch=2, channels=8, spatial=16x16 (stride=1, no downsample
    # => in_channel == out_channel so the identity skip is valid).
    N, C, H, W = 2, 8, 16, 16
    key = jax.random.PRNGKey(0)
    keys = jax.random.split(key, 11)

    x = jax.random.normal(keys[0], (N, C, H, W), jnp.float32)
    w1 = jax.random.normal(keys[1], (C, C, 3, 3), jnp.float32) * 0.1   # OIHW
    w2 = jax.random.normal(keys[2], (C, C, 3, 3), jnp.float32) * 0.1
    g1 = jax.random.uniform(keys[3], (C,), jnp.float32, 0.5, 1.5)
    bt1 = jax.random.normal(keys[4], (C,), jnp.float32) * 0.1
    m1 = jax.random.normal(keys[5], (C,), jnp.float32) * 0.1
    v1 = jax.random.uniform(keys[6], (C,), jnp.float32, 0.5, 1.5)
    g2 = jax.random.uniform(keys[7], (C,), jnp.float32, 0.5, 1.5)
    bt2 = jax.random.normal(keys[8], (C,), jnp.float32) * 0.1
    m2 = jax.random.normal(keys[9], (C,), jnp.float32) * 0.1
    v2 = jax.random.uniform(keys[10], (C,), jnp.float32, 0.5, 1.5)

    params = (w1, g1, bt1, m1, v1, w2, g2, bt2, m2, v2)

    out = jax.block_until_ready(basic_block_pallas(x, *params))
    ref = jax.block_until_ready(basic_block_ref(x, *params))

    # bf16 MXU operands (f32 accumulation) => compare with bf16-level tolerance.
    np.testing.assert_allclose(np.asarray(out), np.asarray(ref),
                               rtol=2e-2, atol=2e-2)
    print("KERNEL_OK")
</pallas_src>

<mosaic_0001>
module attributes {stable_mosaic.version = 11 : i64} {
  func.func @basic_block_kernel(%arg0: i32, %arg1: memref<1x16x16x8xf32, #tpu.memory_space<vmem>>, %arg2: memref<3x24x8xbf16, #tpu.memory_space<vmem>>, %arg3: memref<1x8xf32, #tpu.memory_space<vmem>>, %arg4: memref<3x24x8xbf16, #tpu.memory_space<vmem>>, %arg5: memref<1x8xf32, #tpu.memory_space<vmem>>, %arg6: memref<1x16x16x8xf32, #tpu.memory_space<vmem>>) attributes {dimension_semantics = [#tpu.dimension_semantics<parallel>], iteration_bounds = array<i64: 2>, scalar_prefetch = 0 : i64, scratch_operands = 0 : i64, tpu.core_type = #tpu.core_type<tc>, window_params = [{transform_indices = @transform_0, window_bounds = array<i64: 1, 16, 16, 8>}, {pipeline_mode = #tpu.pipeline_mode<synchronous>, transform_indices = @transform_1, window_bounds = array<i64: 3, 24, 8>}, {pipeline_mode = #tpu.pipeline_mode<synchronous>, transform_indices = @transform_2, window_bounds = array<i64: 1, 8>}, {pipeline_mode = #tpu.pipeline_mode<synchronous>, transform_indices = @transform_3, window_bounds = array<i64: 3, 24, 8>}, {pipeline_mode = #tpu.pipeline_mode<synchronous>, transform_indices = @transform_4, window_bounds = array<i64: 1, 8>}, {transform_indices = @transform_5, window_bounds = array<i64: 1, 16, 16, 8>}]} {
    %c0 = arith.constant 0 : index
    %c0_0 = arith.constant 0 : index
    %c0_1 = arith.constant 0 : index
    %c0_2 = arith.constant 0 : index
    %0 = vector.load %arg1[%c0, %c0_0, %c0_1, %c0_2] : memref<1x16x16x8xf32, #tpu.memory_space<vmem>>, vector<1x16x16x8xf32>
    %1 = vector.shape_cast %0 : vector<1x16x16x8xf32> to vector<16x16x8xf32>
    %cst = arith.constant 0.000000e+00 : f32
    %2 = vector.broadcast %cst : f32 to vector<16x1x8xf32>
    %3 = vector.extract_strided_slice %1 {offsets = [0, 0, 0], sizes = [16, 15, 8], strides = [1, 1, 1]} : vector<16x16x8xf32> to vector<16x15x8xf32>
    %4 = tpu.concatenate %2, %3 in 1 : vector<16x1x8xf32>, vector<16x15x8xf32> -> vector<16x16x8xf32>
    %5 = vector.extract_strided_slice %1 {offsets = [0, 1, 0], sizes = [16, 15, 8], strides = [1, 1, 1]} : vector<16x16x8xf32> to vector<16x15x8xf32>
    %6 = tpu.concatenate %5, %2 in 1 : vector<16x15x8xf32>, vector<16x1x8xf32> -> vector<16x16x8xf32>
    %7 = tpu.concatenate %4, %1, %6 in 2 : vector<16x16x8xf32>, vector<16x16x8xf32>, vector<16x16x8xf32> -> vector<16x16x24xf32>
    %8 = arith.truncf %7 : vector<16x16x24xf32> to vector<16x16x24xbf16>
    %cst_3 = arith.constant 0.000000e+00 : bf16
    %9 = vector.broadcast %cst_3 : bf16 to vector<1x16x24xbf16>
    %10 = vector.extract_strided_slice %8 {offsets = [0, 0, 0], sizes = [15, 16, 24], strides = [1, 1, 1]} : vector<16x16x24xbf16> to vector<15x16x24xbf16>
    %11 = tpu.concatenate %9, %10 in 0 : vector<1x16x24xbf16>, vector<15x16x24xbf16> -> vector<16x16x24xbf16>
    %12 = vector.extract_strided_slice %8 {offsets = [1, 0, 0], sizes = [15, 16, 24], strides = [1, 1, 1]} : vector<16x16x24xbf16> to vector<15x16x24xbf16>
    %13 = tpu.concatenate %12, %9 in 0 : vector<15x16x24xbf16>, vector<1x16x24xbf16> -> vector<16x16x24xbf16>
    %14 = vector.shape_cast %11 : vector<16x16x24xbf16> to vector<256x24xbf16>
    %c0_4 = arith.constant 0 : index
    %c0_5 = arith.constant 0 : index
    %c0_6 = arith.constant 0 : index
    %15 = vector.load %arg2[%c0_4, %c0_5, %c0_6] : memref<3x24x8xbf16, #tpu.memory_space<vmem>>, vector<1x24x8xbf16>
    %16 = vector.shape_cast %15 : vector<1x24x8xbf16> to vector<24x8xbf16>
    %cst_7 = arith.constant dense<0.000000e+00> : vector<256x8xf32>
    %17 = tpu.matmul %14, %16, %cst_7 {dimension_numbers = #tpu.dot_dimension_numbers<[1], [0], [0], [1], [0, 0, 1, 1], [], []>} : vector<256x24xbf16>, vector<24x8xbf16>, vector<256x8xf32> -> vector<256x8xf32>
    %18 = vector.shape_cast %8 : vector<16x16x24xbf16> to vector<256x24xbf16>
    %c1 = arith.constant 1 : index
    %c0_8 = arith.constant 0 : index
    %c0_9 = arith.constant 0 : index
    %19 = vector.load %arg2[%c1, %c0_8, %c0_9] : memref<3x24x8xbf16, #tpu.memory_space<vmem>>, vector<1x24x8xbf16>
    %20 = vector.shape_cast %19 : vector<1x24x8xbf16> to vector<24x8xbf16>
    %cst_10 = arith.constant dense<0.000000e+00> : vector<256x8xf32>
    %21 = tpu.matmul %18, %20, %cst_10 {dimension_numbers = #tpu.dot_dimension_numbers<[1], [0], [0], [1], [0, 0, 1, 1], [], []>} : vector<256x24xbf16>, vector<24x8xbf16>, vector<256x8xf32> -> vector<256x8xf32>
    %22 = arith.addf %17, %21 : vector<256x8xf32>
    %23 = vector.shape_cast %13 : vector<16x16x24xbf16> to vector<256x24xbf16>
    %c2 = arith.constant 2 : index
    %c0_11 = arith.constant 0 : index
    %c0_12 = arith.constant 0 : index
    %24 = vector.load %arg2[%c2, %c0_11, %c0_12] : memref<3x24x8xbf16, #tpu.memory_space<vmem>>, vector<1x24x8xbf16>
    %25 = vector.shape_cast %24 : vector<1x24x8xbf16> to vector<24x8xbf16>
    %cst_13 = arith.constant dense<0.000000e+00> : vector<256x8xf32>
    %26 = tpu.matmul %23, %25, %cst_13 {dimension_numbers = #tpu.dot_dimension_numbers<[1], [0], [0], [1], [0, 0, 1, 1], [], []>} : vector<256x24xbf16>, vector<24x8xbf16>, vector<256x8xf32> -> vector<256x8xf32>
    %27 = arith.addf %22, %26 : vector<256x8xf32>
    %c0_14 = arith.constant 0 : index
    %c0_15 = arith.constant 0 : index
    %28 = vector.load %arg3[%c0_14, %c0_15] : memref<1x8xf32, #tpu.memory_space<vmem>>, vector<1x8xf32>
    %29 = vector.broadcast %28 : vector<1x8xf32> to vector<256x8xf32>
    %30 = arith.addf %27, %29 : vector<256x8xf32>
    %cst_16 = arith.constant 0.000000e+00 : f32
    %31 = vector.broadcast %cst_16 : f32 to vector<256x8xf32>
    %32 = arith.maximumf %30, %31 : vector<256x8xf32>
    %33 = vector.shape_cast %32 : vector<256x8xf32> to vector<16x16x8xf32>
    %cst_17 = arith.constant 0.000000e+00 : f32
    %34 = vector.broadcast %cst_17 : f32 to vector<16x1x8xf32>
    %35 = vector.extract_strided_slice %33 {offsets = [0, 0, 0], sizes = [16, 15, 8], strides = [1, 1, 1]} : vector<16x16x8xf32> to vector<16x15x8xf32>
    %36 = tpu.concatenate %34, %35 in 1 : vector<16x1x8xf32>, vector<16x15x8xf32> -> vector<16x16x8xf32>
    %37 = vector.extract_strided_slice %33 {offsets = [0, 1, 0], sizes = [16, 15, 8], strides = [1, 1, 1]} : vector<16x16x8xf32> to vector<16x15x8xf32>
    %38 = tpu.concatenate %37, %34 in 1 : vector<16x15x8xf32>, vector<16x1x8xf32> -> vector<16x16x8xf32>
    %39 = tpu.concatenate %36, %33, %38 in 2 : vector<16x16x8xf32>, vector<16x16x8xf32>, vector<16x16x8xf32> -> vector<16x16x24xf32>
    %40 = arith.truncf %39 : vector<16x16x24xf32> to vector<16x16x24xbf16>
    %cst_18 = arith.constant 0.000000e+00 : bf16
    %41 = vector.broadcast %cst_18 : bf16 to vector<1x16x24xbf16>
    %42 = vector.extract_strided_slice %40 {offsets = [0, 0, 0], sizes = [15, 16, 24], strides = [1, 1, 1]} : vector<16x16x24xbf16> to vector<15x16x24xbf16>
    %43 = tpu.concatenate %41, %42 in 0 : vector<1x16x24xbf16>, vector<15x16x24xbf16> -> vector<16x16x24xbf16>
    %44 = vector.extract_strided_slice %40 {offsets = [1, 0, 0], sizes = [15, 16, 24], strides = [1, 1, 1]} : vector<16x16x24xbf16> to vector<15x16x24xbf16>
    %45 = tpu.concatenate %44, %41 in 0 : vector<15x16x24xbf16>, vector<1x16x24xbf16> -> vector<16x16x24xbf16>
    %46 = vector.shape_cast %43 : vector<16x16x24xbf16> to vector<256x24xbf16>
    %c0_19 = arith.constant 0 : index
    %c0_20 = arith.constant 0 : index
    %c0_21 = arith.constant 0 : index
    %47 = vector.load %arg4[%c0_19, %c0_20, %c0_21] : memref<3x24x8xbf16, #tpu.memory_space<vmem>>, vector<1x24x8xbf16>
    %48 = vector.shape_cast %47 : vector<1x24x8xbf16> to vector<24x8xbf16>
    %cst_22 = arith.constant dense<0.000000e+00> : vector<256x8xf32>
    %49 = tpu.matmul %46, %48, %cst_22 {dimension_numbers = #tpu.dot_dimension_numbers<[1], [0], [0], [1], [0, 0, 1, 1], [], []>} : vector<256x24xbf16>, vector<24x8xbf16>, vector<256x8xf32> -> vector<256x8xf32>
    %50 = vector.shape_cast %40 : vector<16x16x24xbf16> to vector<256x24xbf16>
    %c1_23 = arith.constant 1 : index
    %c0_24 = arith.constant 0 : index
    %c0_25 = arith.constant 0 : index
    %51 = vector.load %arg4[%c1_23, %c0_24, %c0_25] : memref<3x24x8xbf16, #tpu.memory_space<vmem>>, vector<1x24x8xbf16>
    %52 = vector.shape_cast %51 : vector<1x24x8xbf16> to vector<24x8xbf16>
    %cst_26 = arith.constant dense<0.000000e+00> : vector<256x8xf32>
    %53 = tpu.matmul %50, %52, %cst_26 {dimension_numbers = #tpu.dot_dimension_numbers<[1], [0], [0], [1], [0, 0, 1, 1], [], []>} : vector<256x24xbf16>, vector<24x8xbf16>, vector<256x8xf32> -> vector<256x8xf32>
    %54 = arith.addf %49, %53 : vector<256x8xf32>
    %55 = vector.shape_cast %45 : vector<16x16x24xbf16> to vector<256x24xbf16>
    %c2_27 = arith.constant 2 : index
    %c0_28 = arith.constant 0 : index
    %c0_29 = arith.constant 0 : index
    %56 = vector.load %arg4[%c2_27, %c0_28, %c0_29] : memref<3x24x8xbf16, #tpu.memory_space<vmem>>, vector<1x24x8xbf16>
    %57 = vector.shape_cast %56 : vector<1x24x8xbf16> to vector<24x8xbf16>
    %cst_30 = arith.constant dense<0.000000e+00> : vector<256x8xf32>
    %58 = tpu.matmul %55, %57, %cst_30 {dimension_numbers = #tpu.dot_dimension_numbers<[1], [0], [0], [1], [0, 0, 1, 1], [], []>} : vector<256x24xbf16>, vector<24x8xbf16>, vector<256x8xf32> -> vector<256x8xf32>
    %59 = arith.addf %54, %58 : vector<256x8xf32>
    %c0_31 = arith.constant 0 : index
    %c0_32 = arith.constant 0 : index
    %60 = vector.load %arg5[%c0_31, %c0_32] : memref<1x8xf32, #tpu.memory_space<vmem>>, vector<1x8xf32>
    %61 = vector.broadcast %60 : vector<1x8xf32> to vector<256x8xf32>
    %62 = arith.addf %59, %61 : vector<256x8xf32>
    %63 = vector.shape_cast %62 : vector<256x8xf32> to vector<16x16x8xf32>
    %64 = arith.addf %63, %1 : vector<16x16x8xf32>
    %cst_33 = arith.constant 0.000000e+00 : f32
    %65 = vector.broadcast %cst_33 : f32 to vector<16x16x8xf32>
    %66 = arith.maximumf %64, %65 : vector<16x16x8xf32>
    %c0_34 = arith.constant 0 : index
    %c0_35 = arith.constant 0 : index
    %c0_36 = arith.constant 0 : index
    %c0_37 = arith.constant 0 : index
    %67 = vector.load %arg6[%c0_34, %c0_35, %c0_36, %c0_37] : memref<1x16x16x8xf32, #tpu.memory_space<vmem>>, vector<1x16x16x8xf32>
    %68 = vector.shape_cast %67 : vector<1x16x16x8xf32> to vector<16x16x8xf32>
    %69 = vector.shape_cast %66 : vector<16x16x8xf32> to vector<1x16x16x8xf32>
    tpu.vector_store %arg6[%c0_34, %c0_35, %c0_36, %c0_37], %69 {strides = array<i32>} : memref<1x16x16x8xf32, #tpu.memory_space<vmem>>, vector<1x16x16x8xf32>,
    return
  }
  func.func @transform_0(%arg0: i32) -> (i32, i32, i32, i32) {
    %c0_i32 = arith.constant 0 : i32
    %c0_i32_0 = arith.constant 0 : i32
    %c0_i32_1 = arith.constant 0 : i32
    %c0_i32_2 = arith.constant 0 : i32
    return %arg0, %c0_i32, %c0_i32_0, %c0_i32_1 : i32, i32, i32, i32
  }
  func.func @transform_1(%arg0: i32) -> (i32, i32, i32) {
    %c0_i32 = arith.constant 0 : i32
    %c0_i32_0 = arith.constant 0 : i32
    %c0_i32_1 = arith.constant 0 : i32
    %c0_i32_2 = arith.constant 0 : i32
    return %c0_i32, %c0_i32_0, %c0_i32_1 : i32, i32, i32
  }
  func.func @transform_2(%arg0: i32) -> (i32, i32) {
    %c0_i32 = arith.constant 0 : i32
    %c0_i32_0 = arith.constant 0 : i32
    %c0_i32_1 = arith.constant 0 : i32
    return %c0_i32, %c0_i32_0 : i32, i32
  }
  func.func @transform_3(%arg0: i32) -> (i32, i32, i32) {
    %c0_i32 = arith.constant 0 : i32
    %c0_i32_0 = arith.constant 0 : i32
    %c0_i32_1 = arith.constant 0 : i32
    %c0_i32_2 = arith.constant 0 : i32
    return %c0_i32, %c0_i32_0, %c0_i32_1 : i32, i32, i32
  }
  func.func @transform_4(%arg0: i32) -> (i32, i32) {
    %c0_i32 = arith.constant 0 : i32
    %c0_i32_0 = arith.constant 0 : i32
    %c0_i32_1 = arith.constant 0 : i32
    return %c0_i32, %c0_i32_0 : i32, i32
  }
  func.func @transform_5(%arg0: i32) -> (i32, i32, i32, i32) {
    %c0_i32 = arith.constant 0 : i32
    %c0_i32_0 = arith.constant 0 : i32
    %c0_i32_1 = arith.constant 0 : i32
    %c0_i32_2 = arith.constant 0 : i32
    return %arg0, %c0_i32, %c0_i32_0, %c0_i32_1 : i32, i32, i32, i32
  }
}

</mosaic_0001>

<llo_original>
// kernel: tpu_custom_call.1
$region0: #{tpu_custom_call.1}
  #allocation0 [shape = 'u32[]', space=smem, size = 0x4, offset = 0x4, fixed_abs, tag = 'smem constant byte address 0x4 - core index']
  #allocation1 [shape = 'u32[144,128]{1,0:T(1,128)}', space=vmem, size = 0x12000, scoped, tag = 'internal scratch']
  %s0 = inlined_call_operand.vmem [shape: f32[2,16,16,8], index: 0, kind: input, shape index: {}]
  %s1 = inlined_call_operand.vmem [shape: bf16[3,24,8], index: 1, kind: input, shape index: {}]
  %s2 = inlined_call_operand.vmem [shape: f32[1,8], index: 2, kind: input, shape index: {}]
  %s3 = inlined_call_operand.vmem [shape: bf16[3,24,8], index: 3, kind: input, shape index: {}]
  %s4 = inlined_call_operand.vmem [shape: f32[1,8], index: 4, kind: input, shape index: {}]
  %s5 = inlined_call_operand.vmem [shape: f32[2,16,16,8], index: 5, kind: output, shape index: {}]
  %s6 = sld [smem:[#allocation0]]
  $region53: #{tpu_custom_call.1} parent=0
    _
  %s8 = ssub.s32 1, %s6
  %s9 = scalar_select 0, %s8, %s6
  loop: start=0, step=1, limit=4
  $region2: #{tpu_custom_call.1} parent=0 // loop_pre_header
    _
  $region3: #{tpu_custom_call.1} parent=0 // loop_header
    %s11 = sphi 0, %s15
    %p12 = scmp.ge.s32.totalorder %s11, 4
    %s21 = sphi 0, %s23
    %s24 = sphi 0, %s21
    %s25 = sphi 0, %s24
    %s41 = sphi 0, %s25
    %s45 = sphi 0, %s45
    %s47 = sphi 0, %s45
    %s48 = sphi 0, %s47
    %s62 = sphi 0, %s48
    %s66 = sphi 0, %s66
    %s68 = sphi 0, %s66
    %s69 = sphi 0, %s68
    %s83 = sphi 0, %s69
    %s87 = sphi 0, %s87
    %s89 = sphi 0, %s87
    %s90 = sphi 0, %s89
    %s104 = sphi 0, %s90
    %s108 = sphi 0, %s108
    %s110 = sphi 0, %s108
    %s111 = sphi 0, %s110
    %s125 = sphi 0, %s111
    %s131 = sphi 0, %s133
    %s134 = sphi 0, %s131
    %s135 = sphi 0, %s134
    %s151 = sphi 0, %s135
  $region4: #{tpu_custom_call.1} parent=0 // loop_header_branch
    %14 = sbr.rel (%p12) target = $region8
  $region5: #{tpu_custom_call.1} parent=0 // loop_body
    %s16 = ssub.s32 %s11, 1
    %s17 = ssub.s32 %s11, 2
    %s18 = sadd.s32 %s11, 1
    %s19 = ssub.s32 %s11, %s18
    %p20 = scmp.eq.s32.totalorder %s19, 0
    %s22 = sadd.s32 %s21, 1
    %s23 = scalar_select %p20, %s21, %s22
    %p26 = pneg %p20
    %p27 = scmp.eq.s32.totalorder %s11, 1
    %p28 = por %p26, %p27
    %p29 = scmp.ne.s32.totalorder %s21, %s24
    %p30 = scmp.eq.s32.totalorder %s11, 0
    %p31 = por %p29, %p30
    %p32 = scmp.ne.s32.totalorder %s21, %s24
    %p33 = scmp.eq.s32.totalorder %s16, 1
    %p34 = por %p32, %p33
    %p35 = scmp.ne.s32.totalorder %s24, %s25
    %p36 = scmp.eq.s32.totalorder %s16, 0
    %p37 = por %p35, %p36
    %p38 = scmp.ne.s32.totalorder %s24, %s25
    %p39 = scmp.eq.s32.totalorder %s17, 1
    %p40 = por %p38, %p39
    %p42 = scmp.ne.s32.totalorder %s25, %s41
    %p43 = scmp.eq.s32.totalorder %s17, 0
    %p44 = por %p42, %p43
    %s46 = sadd.s32 %s45, 1
    %p49 = scmp.eq.s32.totalorder %s11, 1
    %p50 = scmp.ne.s32.totalorder %s45, %s47
    %p51 = scmp.eq.s32.totalorder %s11, 0
    %p52 = por %p50, %p51
    %p53 = scmp.ne.s32.totalorder %s45, %s47
    %p54 = scmp.eq.s32.totalorder %s16, 1
    %p55 = por %p53, %p54
    %p56 = scmp.ne.s32.totalorder %s47, %s48
    %p57 = scmp.eq.s32.totalorder %s16, 0
    %p58 = por %p56, %p57
    %p59 = scmp.ne.s32.totalorder %s47, %s48
    %p60 = scmp.eq.s32.totalorder %s17, 1
    %p61 = por %p59, %p60
    %p63 = scmp.ne.s32.totalorder %s48, %s62
    %p64 = scmp.eq.s32.totalorder %s17, 0
    %p65 = por %p63, %p64
    %s67 = sadd.s32 %s66, 1
    %p70 = scmp.eq.s32.totalorder %s11, 1
    %p71 = scmp.ne.s32.totalorder %s66, %s68
    %p72 = scmp.eq.s32.totalorder %s11, 0
    %p73 = por %p71, %p72
    %p74 = scmp.ne.s32.totalorder %s66, %s68
    %p75 = scmp.eq.s32.totalorder %s16, 1
    %p76 = por %p74, %p75
    %p77 = scmp.ne.s32.totalorder %s68, %s69
    %p78 = scmp.eq.s32.totalorder %s16, 0
    %p79 = por %p77, %p78
    %p80 = scmp.ne.s32.totalorder %s68, %s69
    %p81 = scmp.eq.s32.totalorder %s17, 1
    %p82 = por %p80, %p81
    %p84 = scmp.ne.s32.totalorder %s69, %s83
    %p85 = scmp.eq.s32.totalorder %s17, 0
    %p86 = por %p84, %p85
    %s88 = sadd.s32 %s87, 1
    %p91 = scmp.eq.s32.totalorder %s11, 1
    %p92 = scmp.ne.s32.totalorder %s87, %s89
    %p93 = scmp.eq.s32.totalorder %s11, 0
    %p94 = por %p92, %p93
    %p95 = scmp.ne.s32.totalorder %s87, %s89
    %p96 = scmp.eq.s32.totalorder %s16, 1
    %p97 = por %p95, %p96
    %p98 = scmp.ne.s32.totalorder %s89, %s90
    %p99 = scmp.eq.s32.totalorder %s16, 0
    %p100 = por %p98, %p99
    %p101 = scmp.ne.s32.totalorder %s89, %s90
    %p102 = scmp.eq.s32.totalorder %s17, 1
    %p103 = por %p101, %p102
    %p105 = scmp.ne.s32.totalorder %s90, %s104
    %p106 = scmp.eq.s32.totalorder %s17, 0
    %p107 = por %p105, %p106
    %s109 = sadd.s32 %s108, 1
    %p112 = scmp.eq.s32.totalorder %s11, 1
    %p113 = scmp.ne.s32.totalorder %s108, %s110
    %p114 = scmp.eq.s32.totalorder %s11, 0
    %p115 = por %p113, %p114
    %p116 = scmp.ne.s32.totalorder %s108, %s110
    %p117 = scmp.eq.s32.totalorder %s16, 1
    %p118 = por %p116, %p117
    %p119 = scmp.ne.s32.totalorder %s110, %s111
    %p120 = scmp.eq.s32.totalorder %s16, 0
    %p121 = por %p119, %p120
    %p122 = scmp.ne.s32.totalorder %s110, %s111
    %p123 = scmp.eq.s32.totalorder %s17, 1
    %p124 = por %p122, %p123
    %p126 = scmp.ne.s32.totalorder %s111, %s125
    %p127 = scmp.eq.s32.totalorder %s17, 0
    %p128 = por %p126, %p127
    %s129 = ssub.s32 %s11, %s18
    %p130 = scmp.eq.s32.totalorder %s129, 0
    %s132 = sadd.s32 %s131, 1
    %s133 = scalar_select %p130, %s131, %s132
    %p136 = pneg %p130
    %p137 = scmp.eq.s32.totalorder %s11, 1
    %p138 = por %p136, %p137
    %p139 = scmp.ne.s32.totalorder %s131, %s134
    %p140 = scmp.eq.s32.totalorder %s11, 0
    %p141 = por %p139, %p140
    %p142 = scmp.ne.s32.totalorder %s131, %s134
    %p143 = scmp.eq.s32.totalorder %s16, 1
    %p144 = por %p142, %p143
    %p145 = scmp.ne.s32.totalorder %s134, %s135
    %p146 = scmp.eq.s32.totalorder %s16, 0
    %p147 = por %p145, %p146
    %p148 = scmp.ne.s32.totalorder %s134, %s135
    %p149 = scmp.eq.s32.totalorder %s17, 1
    %p150 = por %p148, %p149
    %p152 = scmp.ne.s32.totalorder %s135, %s151
    %p153 = scmp.eq.s32.totalorder %s17, 0
    %p154 = por %p152, %p153
    %p155 = scmp.le.s32.totalorder 1, %s11
    %p156 = scmp.lt.s32.totalorder %s11, 3
    %p157 = pnand %p155, %p156
    %p158 = pneg %p157
    // Predicated region
    $region9: #{tpu_custom_call.1} parent=5 // pred_check
      _
    $region10: #{tpu_custom_call.1} parent=5 // pred_check_branch
      %160 = sbr.rel (%p157) target = $region12
    $region11: #{tpu_custom_call.1} parent=5 // pred_region
      %s161 = ssub.s32 %s11, 1
      // Predicated region
      $region13: #{tpu_custom_call.1} parent=11 // pred_check
        %p162 = pneg %p58
      $region14: #{tpu_custom_call.1} parent=11 // pred_check_branch
        %164 = sbr.rel (%p162) target = $region16
      $region15: #{tpu_custom_call.1} parent=11 // pred_region
        _
      $region16: #{tpu_custom_call.1} parent=11 // pred_fallthru
        _
      // Predicated region
      $region17: #{tpu_custom_call.1} parent=11 // pred_check
        %p165 = pneg %p79
      $region18: #{tpu_custom_call.1} parent=11 // pred_check_branch
        %167 = sbr.rel (%p165) target = $region20
      $region19: #{tpu_custom_call.1} parent=11 // pred_region
        _
      $region20: #{tpu_custom_call.1} parent=11 // pred_fallthru
        _
      // Predicated region
      $region21: #{tpu_custom_call.1} parent=11 // pred_check
        %p168 = pneg %p100
      $region22: #{tpu_custom_call.1} parent=11 // pred_check_branch
        %170 = sbr.rel (%p168) target = $region24
      $region23: #{tpu_custom_call.1} parent=11 // pred_region
        _
      $region24: #{tpu_custom_call.1} parent=11 // pred_fallthru
        _
      // Predicated region
      $region25: #{tpu_custom_call.1} parent=11 // pred_check
        %p171 = pneg %p121
      $region26: #{tpu_custom_call.1} parent=11 // pred_check_branch
        %173 = sbr.rel (%p171) target = $region28
      $region27: #{tpu_custom_call.1} parent=11 // pred_region
        _
      $region28: #{tpu_custom_call.1} parent=11 // pred_fallthru
        _
    $region12: #{tpu_custom_call.1} parent=5 // pred_fallthru
      _
    %p174 = scmp.lt.s32.totalorder %s11, 2
    // Predicated region
    $region29: #{tpu_custom_call.1} parent=5 // pred_check
      %p175 = pneg %p174
    $region30: #{tpu_custom_call.1} parent=5 // pred_check_branch
      %177 = sbr.rel (%p175) target = $region32
    $region31: #{tpu_custom_call.1} parent=5 // pred_region
      // Predicated region
      $region33: #{tpu_custom_call.1} parent=31 // pred_check
        %p178 = pneg %p31
      $region34: #{tpu_custom_call.1} parent=31 // pred_check_branch
        %180 = sbr.rel (%p178) target = $region36
      $region35: #{tpu_custom_call.1} parent=31 // pred_region
        %p181 = scmp.lt.s32.totalorder %s11, 1
        %s182 = scalar_select %p181, %s11, 1
        %s183 = smul.addr %s182, 32
        %s184 = smul.addr %s183, 8
        %s185 = scalar_lea.vmem %s0, %s184
      $region36: #{tpu_custom_call.1} parent=31 // pred_fallthru
        _
    $region32: #{tpu_custom_call.1} parent=5 // pred_fallthru
      _
    %p186 = scmp.le.s32.totalorder 1, %s11
    %p187 = scmp.lt.s32.totalorder %s11, 3
    %p188 = pnand %p186, %p187
    %p189 = pneg %p188
    // Predicated region
    $region37: #{tpu_custom_call.1} parent=5 // pred_check
      _
    $region38: #{tpu_custom_call.1} parent=5 // pred_check_branch
      %191 = sbr.rel (%p188) target = $region40
    $region39: #{tpu_custom_call.1} parent=5 // pred_region
      %s192 = ssub.s32 %s11, 1
      %p193 = scmp.lt.s32.totalorder %s16, 1
      %s194 = scalar_select %p193, %s16, 1
      %s195 = smul.addr %s194, 32
      %s196 = smul.addr %s195, 8
      %s197 = scalar_lea.vmem %s0, %s196
      %p198 = pneg %p37
      %p199 = pneg %p34
      %p200 = pneg %p58
      %p201 = pneg %p55
      %p202 = pneg %p79
      %p203 = pneg %p76
      %p204 = pneg %p100
      %p205 = pneg %p97
      %p206 = pneg %p121
      %p207 = pneg %p118
      %p208 = pneg %p147
      %p209 = pneg %p144
      %p210 = scmp.lt.s32.totalorder %s16, 1
      %s211 = scalar_select %p210, %s16, 1
      %s212 = smul.addr %s211, 32
      %s213 = smul.addr %s212, 8
      %s214 = scalar_lea.vmem %s5, %s213
      %p215 = scmp.lt.s32.totalorder %s16, 1
      %s216 = scalar_select %p215, %s16, 1
      %s217 = smul.addr %s216, 32
      %s218 = smul.addr %s217, 8
      %s219 = scalar_lea.vmem %s0, %s218
      %p220 = scmp.lt.s32.totalorder %s16, 1
      %s221 = scalar_select %p220, %s16, 1
      %s222 = smul.addr %s221, 32
      %s223 = smul.addr %s222, 8
      %s224 = scalar_lea.vmem %s5, %s223
      %v226 = vld [vmem:[%s219] sm:$0xff]
      %v227 = vld [vmem:[%s219 + $0x8] sm:$0xff]
      %v228 = vld [vmem:[%s219 + $0x10] sm:$0xff]
      %v229 = vld [vmem:[%s219 + $0x18] sm:$0xff]
      %v230 = vld [vmem:[%s219 + $0x20] sm:$0xff]
      %v231 = vld [vmem:[%s219 + $0x28] sm:$0xff]
      %v232 = vld [vmem:[%s219 + $0x30] sm:$0xff]
      %v233 = vld [vmem:[%s219 + $0x38] sm:$0xff]
      %v234 = vld [vmem:[%s219 + $0x40] sm:$0xff]
      %v235 = vld [vmem:[%s219 + $0x48] sm:$0xff]
      %v236 = vld [vmem:[%s219 + $0x50] sm:$0xff]
      %v237 = vld [vmem:[%s219 + $0x58] sm:$0xff]
      %v238 = vld [vmem:[%s219 + $0x60] sm:$0xff]
      %v239 = vld [vmem:[%s219 + $0x68] sm:$0xff]
      %v240 = vld [vmem:[%s219 + $0x70] sm:$0xff]
      %v241 = vld [vmem:[%s219 + $0x78] sm:$0xff]
      %v242 = vld [vmem:[%s219 + $0x80] sm:$0xff]
      %v243 = vld [vmem:[%s219 + $0x88] sm:$0xff]
      %v244 = vld [vmem:[%s219 + $0x90] sm:$0xff]
      %v245 = vld [vmem:[%s219 + $0x98] sm:$0xff]
      %v246 = vld [vmem:[%s219 + $0xa0] sm:$0xff]
      %v247 = vld [vmem:[%s219 + $0xa8] sm:$0xff]
      %v248 = vld [vmem:[%s219 + $0xb0] sm:$0xff]
      %v249 = vld [vmem:[%s219 + $0xb8] sm:$0xff]
      %v250 = vld [vmem:[%s219 + $0xc0] sm:$0xff]
      %v251 = vld [vmem:[%s219 + $0xc8] sm:$0xff]
      %v252 = vld [vmem:[%s219 + $0xd0] sm:$0xff]
      %v253 = vld [vmem:[%s219 + $0xd8] sm:$0xff]
      %v254 = vld [vmem:[%s219 + $0xe0] sm:$0xff]
      %v255 = vld [vmem:[%s219 + $0xe8] sm:$0xff]
      %v256 = vld [vmem:[%s219 + $0xf0] sm:$0xff]
      %v257 = vld [vmem:[%s219 + $0xf8] sm:$0xff]
      %vm290 = vcmask 1040384
      %v291 = vrot.slane %v226, 7
      %v292 = vrot.slane %v227, 7
      %v293 = vsel %vm290, %v291, %v292
      %v294 = vrot.slane %v228, 7
      %v295 = vrot.slane %v229, 7
      %v296 = vsel %vm290, %v294, %v295
      %v297 = vrot.slane %v230, 7
      %v298 = vrot.slane %v231, 7
      %v299 = vsel %vm290, %v297, %v298
      %v300 = vrot.slane %v232, 7
      %v301 = vrot.slane %v233, 7
      %v302 = vsel %vm290, %v300, %v301
      %v303 = vrot.slane %v234, 7
      %v304 = vrot.slane %v235, 7
      %v305 = vsel %vm290, %v303, %v304
      %v306 = vrot.slane %v236, 7
      %v307 = vrot.slane %v237, 7
      %v308 = vsel %vm290, %v306, %v307
      %v309 = vrot.slane %v238, 7
      %v310 = vrot.slane %v239, 7
      %v311 = vsel %vm290, %v309, %v310
      %v312 = vrot.slane %v240, 7
      %v313 = vrot.slane %v241, 7
      %v314 = vsel %vm290, %v312, %v313
      %v315 = vrot.slane %v242, 7
      %v316 = vrot.slane %v243, 7
      %v317 = vsel %vm290, %v315, %v316
      %v318 = vrot.slane %v244, 7
      %v319 = vrot.slane %v245, 7
      %v320 = vsel %vm290, %v318, %v319
      %v321 = vrot.slane %v246, 7
      %v322 = vrot.slane %v247, 7
      %v323 = vsel %vm290, %v321, %v322
      %v324 = vrot.slane %v248, 7
      %v325 = vrot.slane %v249, 7
      %v326 = vsel %vm290, %v324, %v325
      %v327 = vrot.slane %v250, 7
      %v328 = vrot.slane %v251, 7
      %v329 = vsel %vm290, %v327, %v328
      %v330 = vrot.slane %v252, 7
      %v331 = vrot.slane %v253, 7
      %v332 = vsel %vm290, %v330, %v331
      %v333 = vrot.slane %v254, 7
      %v334 = vrot.slane %v255, 7
      %v335 = vsel %vm290, %v333, %v334
      %v336 = vrot.slane %v256, 7
      %v337 = vrot.slane %v257, 7
      %v338 = vsel %vm290, %v336, %v337
      %v371 = vsel %vm290, 0.0, %v291
      %v372 = vsel %vm290, 0.0, %v294
      %v373 = vsel %vm290, 0.0, %v297
      %v374 = vsel %vm290, 0.0, %v300
      %v375 = vsel %vm290, 0.0, %v303
      %v376 = vsel %vm290, 0.0, %v306
      %v377 = vsel %vm290, 0.0, %v309
      %v378 = vsel %vm290, 0.0, %v312
      %v379 = vsel %vm290, 0.0, %v315
      %v380 = vsel %vm290, 0.0, %v318
      %v381 = vsel %vm290, 0.0, %v321
      %v382 = vsel %vm290, 0.0, %v324
      %v383 = vsel %vm290, 0.0, %v327
      %v384 = vsel %vm290, 0.0, %v330
      %v385 = vsel %vm290, 0.0, %v333
      %v386 = vsel %vm290, 0.0, %v336
      %vm387 = vcmask 1046528
      %v388 = vrot.slane %v226, 1
      %v389 = vrot.slane %v227, 1
      %v390 = vsel %vm387, %v388, %v389
      %v391 = vrot.slane %v228, 1
      %v392 = vrot.slane %v229, 1
      %v393 = vsel %vm387, %v391, %v392
      %v394 = vrot.slane %v230, 1
      %v395 = vrot.slane %v231, 1
      %v396 = vsel %vm387, %v394, %v395
      %v397 = vrot.slane %v232, 1
      %v398 = vrot.slane %v233, 1
      %v399 = vsel %vm387, %v397, %v398
      %v400 = vrot.slane %v234, 1
      %v401 = vrot.slane %v235, 1
      %v402 = vsel %vm387, %v400, %v401
      %v403 = vrot.slane %v236, 1
      %v404 = vrot.slane %v237, 1
      %v405 = vsel %vm387, %v403, %v404
      %v406 = vrot.slane %v238, 1
      %v407 = vrot.slane %v239, 1
      %v408 = vsel %vm387, %v406, %v407
      %v409 = vrot.slane %v240, 1
      %v410 = vrot.slane %v241, 1
      %v411 = vsel %vm387, %v409, %v410
      %v412 = vrot.slane %v242, 1
      %v413 = vrot.slane %v243, 1
      %v414 = vsel %vm387, %v412, %v413
      %v415 = vrot.slane %v244, 1
      %v416 = vrot.slane %v245, 1
      %v417 = vsel %vm387, %v415, %v416
      %v418 = vrot.slane %v246, 1
      %v419 = vrot.slane %v247, 1
      %v420 = vsel %vm387, %v418, %v419
      %v421 = vrot.slane %v248, 1
      %v422 = vrot.slane %v249, 1
      %v423 = vsel %vm387, %v421, %v422
      %v424 = vrot.slane %v250, 1
      %v425 = vrot.slane %v251, 1
      %v426 = vsel %vm387, %v424, %v425
      %v427 = vrot.slane %v252, 1
      %v428 = vrot.slane %v253, 1
      %v429 = vsel %vm387, %v427, %v428
      %v430 = vrot.slane %v254, 1
      %v431 = vrot.slane %v255, 1
      %v432 = vsel %vm387, %v430, %v431
      %v433 = vrot.slane %v256, 1
      %v434 = vrot.slane %v257, 1
      %v435 = vsel %vm387, %v433, %v434
      %v452 = vsel %vm387, %v389, 0.0
      %v453 = vsel %vm387, %v392, 0.0
      %v454 = vsel %vm387, %v395, 0.0
      %v455 = vsel %vm387, %v398, 0.0
      %v456 = vsel %vm387, %v401, 0.0
      %v457 = vsel %vm387, %v404, 0.0
      %v458 = vsel %vm387, %v407, 0.0
      %v459 = vsel %vm387, %v410, 0.0
      %v460 = vsel %vm387, %v413, 0.0
      %v461 = vsel %vm387, %v416, 0.0
      %v462 = vsel %vm387, %v419, 0.0
      %v463 = vsel %vm387, %v422, 0.0
      %v464 = vsel %vm387, %v425, 0.0
      %v465 = vsel %vm387, %v428, 0.0
      %v466 = vsel %vm387, %v431, 0.0
      %v467 = vsel %vm387, %v434, 0.0
      %468 = vrot.lane.b32.xlu0 %v226, 8
      %v469 = vpop.permute.xlu0 %468
      %470 = vrot.lane.b32.xlu0 %v227, 8
      %v471 = vpop.permute.xlu0 %470
      %472 = vrot.lane.b32.xlu0 %v228, 8
      %v473 = vpop.permute.xlu0 %472
      %474 = vrot.lane.b32.xlu0 %v229, 8
      %v475 = vpop.permute.xlu0 %474
      %476 = vrot.lane.b32.xlu0 %v230, 8
      %v477 = vpop.permute.xlu0 %476
      %478 = vrot.lane.b32.xlu0 %v231, 8
      %v479 = vpop.permute.xlu0 %478
      %480 = vrot.lane.b32.xlu0 %v232, 8
      %v481 = vpop.permute.xlu0 %480
      %482 = vrot.lane.b32.xlu0 %v233, 8
      %v483 = vpop.permute.xlu0 %482
      %484 = vrot.lane.b32.xlu0 %v234, 8
      %v485 = vpop.permute.xlu0 %484
      %486 = vrot.lane.b32.xlu0 %v235, 8
      %v487 = vpop.permute.xlu0 %486
      %488 = vrot.lane.b32.xlu0 %v236, 8
      %v489 = vpop.permute.xlu0 %488
      %490 = vrot.lane.b32.xlu0 %v237, 8
      %v491 = vpop.permute.xlu0 %490
      %492 = vrot.lane.b32.xlu0 %v238, 8
      %v493 = vpop.permute.xlu0 %492
      %494 = vrot.lane.b32.xlu0 %v239, 8
      %v495 = vpop.permute.xlu0 %494
      %496 = vrot.lane.b32.xlu0 %v240, 8
      %v497 = vpop.permute.xlu0 %496
      %498 = vrot.lane.b32.xlu0 %v241, 8
      %v499 = vpop.permute.xlu0 %498
      %500 = vrot.lane.b32.xlu0 %v242, 8
      %v501 = vpop.permute.xlu0 %500
      %502 = vrot.lane.b32.xlu0 %v243, 8
      %v503 = vpop.permute.xlu0 %502
      %504 = vrot.lane.b32.xlu0 %v244, 8
      %v505 = vpop.permute.xlu0 %504
      %506 = vrot.lane.b32.xlu0 %v245, 8
      %v507 = vpop.permute.xlu0 %506
      %508 = vrot.lane.b32.xlu0 %v246, 8
      %v509 = vpop.permute.xlu0 %508
      %510 = vrot.lane.b32.xlu0 %v247, 8
      %v511 = vpop.permute.xlu0 %510
      %512 = vrot.lane.b32.xlu0 %v248, 8
      %v513 = vpop.permute.xlu0 %512
      %514 = vrot.lane.b32.xlu0 %v249, 8
      %v515 = vpop.permute.xlu0 %514
      %516 = vrot.lane.b32.xlu0 %v250, 8
      %v517 = vpop.permute.xlu0 %516
      %518 = vrot.lane.b32.xlu0 %v251, 8
      %v519 = vpop.permute.xlu0 %518
      %520 = vrot.lane.b32.xlu0 %v252, 8
      %v521 = vpop.permute.xlu0 %520
      %522 = vrot.lane.b32.xlu0 %v253, 8
      %v523 = vpop.permute.xlu0 %522
      %524 = vrot.lane.b32.xlu0 %v254, 8
      %v525 = vpop.permute.xlu0 %524
      %526 = vrot.lane.b32.xlu0 %v255, 8
      %v527 = vpop.permute.xlu0 %526
      %528 = vrot.lane.b32.xlu0 %v256, 8
      %v529 = vpop.permute.xlu0 %528
      %530 = vrot.lane.b32.xlu0 %v257, 8
      %v531 = vpop.permute.xlu0 %530
      %580 = vrot.lane.b32.xlu0 %v390, 16
      %v581 = vpop.permute.xlu0 %580
      %582 = vrot.lane.b32.xlu0 %v452, 16
      %v583 = vpop.permute.xlu0 %582
      %584 = vrot.lane.b32.xlu0 %v393, 16
      %v585 = vpop.permute.xlu0 %584
      %586 = vrot.lane.b32.xlu0 %v453, 16
      %v587 = vpop.permute.xlu0 %586
      %588 = vrot.lane.b32.xlu0 %v396, 16
      %v589 = vpop.permute.xlu0 %588
      %590 = vrot.lane.b32.xlu0 %v454, 16
      %v591 = vpop.permute.xlu0 %590
      %592 = vrot.lane.b32.xlu0 %v399, 16
      %v593 = vpop.permute.xlu0 %592
      %594 = vrot.lane.b32.xlu0 %v455, 16
      %v595 = vpop.permute.xlu0 %594
      %596 = vrot.lane.b32.xlu0 %v402, 16
      %v597 = vpop.permute.xlu0 %596
      %598 = vrot.lane.b32.xlu0 %v456, 16
      %v599 = vpop.permute.xlu0 %598
      %600 = vrot.lane.b32.xlu0 %v405, 16
      %v601 = vpop.permute.xlu0 %600
      %602 = vrot.lane.b32.xlu0 %v457, 16
      %v603 = vpop.permute.xlu0 %602
      %604 = vrot.lane.b32.xlu0 %v408, 16
      %v605 = vpop.permute.xlu0 %604
      %606 = vrot.lane.b32.xlu0 %v458, 16
      %v607 = vpop.permute.xlu0 %606
      %608 = vrot.lane.b32.xlu0 %v411, 16
      %v609 = vpop.permute.xlu0 %608
      %610 = vrot.lane.b32.xlu0 %v459, 16
      %v611 = vpop.permute.xlu0 %610
      %612 = vrot.lane.b32.xlu0 %v414, 16
      %v613 = vpop.permute.xlu0 %612
      %614 = vrot.lane.b32.xlu0 %v460, 16
      %v615 = vpop.permute.xlu0 %614
      %616 = vrot.lane.b32.xlu0 %v417, 16
      %v617 = vpop.permute.xlu0 %616
      %618 = vrot.lane.b32.xlu0 %v461, 16
      %v619 = vpop.permute.xlu0 %618
      %620 = vrot.lane.b32.xlu0 %v420, 16
      %v621 = vpop.permute.xlu0 %620
      %622 = vrot.lane.b32.xlu0 %v462, 16
      %v623 = vpop.permute.xlu0 %622
      %624 = vrot.lane.b32.xlu0 %v423, 16
      %v625 = vpop.permute.xlu0 %624
      %626 = vrot.lane.b32.xlu0 %v463, 16
      %v627 = vpop.permute.xlu0 %626
      %628 = vrot.lane.b32.xlu0 %v426, 16
      %v629 = vpop.permute.xlu0 %628
      %630 = vrot.lane.b32.xlu0 %v464, 16
      %v631 = vpop.permute.xlu0 %630
      %632 = vrot.lane.b32.xlu0 %v429, 16
      %v633 = vpop.permute.xlu0 %632
      %634 = vrot.lane.b32.xlu0 %v465, 16
      %v635 = vpop.permute.xlu0 %634
      %636 = vrot.lane.b32.xlu0 %v432, 16
      %v637 = vpop.permute.xlu0 %636
      %638 = vrot.lane.b32.xlu0 %v466, 16
      %v639 = vpop.permute.xlu0 %638
      %640 = vrot.lane.b32.xlu0 %v435, 16
      %v641 = vpop.permute.xlu0 %640
      %642 = vrot.lane.b32.xlu0 %v467, 16
      %v643 = vpop.permute.xlu0 %642
      %vm676 = vcmask 64512
      %v677 = vsel %vm676, %v371, %v469
      %v678 = vsel %vm676, %v293, %v471
      %v679 = vsel %vm676, %v372, %v473
      %v680 = vsel %vm676, %v296, %v475
      %v681 = vsel %vm676, %v373, %v477
      %v682 = vsel %vm676, %v299, %v479
      %v683 = vsel %vm676, %v374, %v481
      %v684 = vsel %vm676, %v302, %v483
      %v685 = vsel %vm676, %v375, %v485
      %v686 = vsel %vm676, %v305, %v487
      %v687 = vsel %vm676, %v376, %v489
      %v688 = vsel %vm676, %v308, %v491
      %v689 = vsel %vm676, %v377, %v493
      %v690 = vsel %vm676, %v311, %v495
      %v691 = vsel %vm676, %v378, %v497
      %v692 = vsel %vm676, %v314, %v499
      %v693 = vsel %vm676, %v379, %v501
      %v694 = vsel %vm676, %v317, %v503
      %v695 = vsel %vm676, %v380, %v505
      %v696 = vsel %vm676, %v320, %v507
      %v697 = vsel %vm676, %v381, %v509
      %v698 = vsel %vm676, %v323, %v511
      %v699 = vsel %vm676, %v382, %v513
      %v700 = vsel %vm676, %v326, %v515
      %v701 = vsel %vm676, %v383, %v517
      %v702 = vsel %vm676, %v329, %v519
      %v703 = vsel %vm676, %v384, %v521
      %v704 = vsel %vm676, %v332, %v523
      %v705 = vsel %vm676, %v385, %v525
      %v706 = vsel %vm676, %v335, %v527
      %v707 = vsel %vm676, %v386, %v529
      %v708 = vsel %vm676, %v338, %v531
      %vm709 = vcmask 130048
      %v710 = vsel %vm709, %v677, %v581
      %v711 = vsel %vm709, %v678, %v583
      %v712 = vsel %vm709, %v679, %v585
      %v713 = vsel %vm709, %v680, %v587
      %v714 = vsel %vm709, %v681, %v589
      %v715 = vsel %vm709, %v682, %v591
      %v716 = vsel %vm709, %v683, %v593
      %v717 = vsel %vm709, %v684, %v595
      %v718 = vsel %vm709, %v685, %v597
      %v719 = vsel %vm709, %v686, %v599
      %v720 = vsel %vm709, %v687, %v601
      %v721 = vsel %vm709, %v688, %v603
      %v722 = vsel %vm709, %v689, %v605
      %v723 = vsel %vm709, %v690, %v607
      %v724 = vsel %vm709, %v691, %v609
      %v725 = vsel %vm709, %v692, %v611
      %v726 = vsel %vm709, %v693, %v613
      %v727 = vsel %vm709, %v694, %v615
      %v728 = vsel %vm709, %v695, %v617
      %v729 = vsel %vm709, %v696, %v619
      %v730 = vsel %vm709, %v697, %v621
      %v731 = vsel %vm709, %v698, %v623
      %v732 = vsel %vm709, %v699, %v625
      %v733 = vsel %vm709, %v700, %v627
      %v734 = vsel %vm709, %v701, %v629
      %v735 = vsel %vm709, %v702, %v631
      %v736 = vsel %vm709, %v703, %v633
      %v737 = vsel %vm709, %v704, %v635
      %v738 = vsel %vm709, %v705, %v637
      %v739 = vsel %vm709, %v706, %v639
      %v740 = vsel %vm709, %v707, %v641
      %v741 = vsel %vm709, %v708, %v643
      %v742 = vpack.c.bf16 %v711, %v710
      %v743 = vpack.c.bf16 %v713, %v712
      %v744 = vpack.c.bf16 %v715, %v714
      %v745 = vpack.c.bf16 %v717, %v716
      %v746 = vpack.c.bf16 %v719, %v718
      %v747 = vpack.c.bf16 %v721, %v720
      %v748 = vpack.c.bf16 %v723, %v722
      %v749 = vpack.c.bf16 %v725, %v724
      %v750 = vpack.c.bf16 %v727, %v726
      %v751 = vpack.c.bf16 %v729, %v728
      %v752 = vpack.c.bf16 %v731, %v730
      %v753 = vpack.c.bf16 %v733, %v732
      %v754 = vpack.c.bf16 %v735, %v734
      %v755 = vpack.c.bf16 %v737, %v736
      %v756 = vpack.c.bf16 %v739, %v738
      %v757 = vpack.c.bf16 %v741, %v740
      %v758 = vld [vmem:[%s1] sm:$0xf]
      %v759 = vld [vmem:[%s1 + $0x4] sm:$0xf]
      %v760 = vld [vmem:[%s1 + $0x8] sm:$0xf]
      %s761 = scalar_lea.vmem %s1, 12
      %v762 = vld [vmem:[%s761] sm:$0xf]
      %v763 = vld [vmem:[%s761 + $0x4] sm:$0xf]
      %v764 = vld [vmem:[%s761 + $0x8] sm:$0xf]
      %v768 = vunpack.c.l.b16 %v762
      %v769 = vunpack.c.l.b16 %v763
      %v770 = vunpack.c.l.b16 %v764
      %v771 = vpack.c.b16 %v769, %v768
      %v772 = vpack.c.b16 %v770, %v770
      %vm774 = vcmask 195584
      %v776 = vsel %vm774, %v742, 0
      %v779 = vsel %vm774, %v743, 0
      %v782 = vsel %vm774, %v744, 0
      %v785 = vsel %vm774, %v745, 0
      %v788 = vsel %vm774, %v746, 0
      %v791 = vsel %vm774, %v747, 0
      %v794 = vsel %vm774, %v748, 0
      %v797 = vsel %vm774, %v749, 0
      %v800 = vsel %vm774, %v750, 0
      %v803 = vsel %vm774, %v751, 0
      %v806 = vsel %vm774, %v752, 0
      %v809 = vsel %vm774, %v753, 0
      %v812 = vsel %vm774, %v754, 0
      %v815 = vsel %vm774, %v755, 0
      %v818 = vsel %vm774, %v756, 0
      %v821 = vsel %vm774, %v757, 0
      %vm823 = vcmask 1043456
      %v825 = vsel %vm823, %v772, 0
      %827 = vmatprep.subr.bf16.mxu0 0
      %828 = vmatpush1.bf16.msra.mxu0 %v771
      %829 = vmatprep.subr.bf16.mxu0 0
      %830 = vmatpush1.bf16.msra.mxu0 %v825
      %831 = vmatprep.subr.bf16.mxu0 0
      %832 = vmatpush1.bf16.msra.mxu0 0
      %833 = vmatprep.subr.bf16.mxu0 0
      %834 = vmatpush1.bf16.msra.mxu0 0
      %835 = vmatprep.subr.bf16.mxu0 0
      %836 = vmatpush1.bf16.msra.mxu0 0
      %837 = vmatprep.subr.bf16.mxu0 0
      %838 = vmatpush1.bf16.msra.mxu0 0
      %839 = vmatprep.subr.bf16.mxu0 0
      %840 = vmatpush1.bf16.msra.mxu0 0
      %841 = vmatprep.subr.bf16.mxu0 0
      %842 = vmatpush1.bf16.msra.mxu0 0
      %843 = vmatprep.subr.bf16.mxu0 0
      %844 = vmatpush1.bf16.msra.mxu0 0
      %845 = vmatprep.subr.bf16.mxu0 0
      %846 = vmatpush1.bf16.msra.mxu0 0
      %847 = vmatprep.subr.bf16.mxu0 0
      %848 = vmatpush1.bf16.msra.mxu0 0
      %849 = vmatprep.subr.bf16.mxu0 0
      %850 = vmatpush1.bf16.msra.mxu0 0
      %851 = vmatprep.subr.bf16.mxu0 0
      %852 = vmatpush1.bf16.msra.mxu0 0
      %853 = vmatprep.subr.bf16.mxu0 0
      %854 = vmatpush1.bf16.msra.mxu0 0
      %855 = vmatprep.subr.bf16.mxu0 0
      %856 = vmatpush1.bf16.msra.mxu0 0
      %857 = vmatprep.subr.bf16.mxu0 0
      %858 = vmatpush1.bf16.msra.mxu0 0
      %859 = vmatprep.mubr.bf16.mxu0 0
      %860 = vmatmul.mubr.bf16.gmra.mrb[0].mxu0 %v776
      %v861 = vpop.f32.mrb[0].mxu0
      %v862 = vadd.f32 0.0, %v861
      %v863 = vpop.f32.mrb[0].mxu0
      %v864 = vpop.f32.mrb[0].mxu0
      %v865 = vadd.f32 0.0, %v864
      %v866 = vpop.f32.mrb[0].mxu0
      %867 = vmatprep.mubr.bf16.mxu0 0
      %868 = vmatmul.mubr.bf16.gmra.mrb[0].mxu0 %v779
      %v869 = vpop.f32.mrb[0].mxu0
      %v870 = vadd.f32 0.0, %v869
      %v871 = vpop.f32.mrb[0].mxu0
      %v872 = vpop.f32.mrb[0].mxu0
      %v873 = vadd.f32 0.0, %v872
      %v874 = vpop.f32.mrb[0].mxu0
      %875 = vmatprep.mubr.bf16.mxu0 0
      %876 = vmatmul.mubr.bf16.gmra.mrb[0].mxu0 %v782
      %v877 = vpop.f32.mrb[0].mxu0
      %v878 = vadd.f32 0.0, %v877
      %v879 = vpop.f32.mrb[0].mxu0
      %v880 = vpop.f32.mrb[0].mxu0
      %v881 = vadd.f32 0.0, %v880
      %v882 = vpop.f32.mrb[0].mxu0
      %883 = vmatprep.mubr.bf16.mxu0 0
      %884 = vmatmul.mubr.bf16.gmra.mrb[0].mxu0 %v785
      %v885 = vpop.f32.mrb[0].mxu0
      %v886 = vadd.f32 0.0, %v885
      %v887 = vpop.f32.mrb[0].mxu0
      %v888 = vpop.f32.mrb[0].mxu0
      %v889 = vadd.f32 0.0, %v888
      %v890 = vpop.f32.mrb[0].mxu0
      %891 = vmatprep.mubr.bf16.mxu0 0
      %892 = vmatmul.mubr.bf16.gmra.mrb[0].mxu0 %v788
      %v893 = vpop.f32.mrb[0].mxu0
      %v894 = vadd.f32 0.0, %v893
      %v895 = vpop.f32.mrb[0].mxu0
      %v896 = vpop.f32.mrb[0].mxu0
      %v897 = vadd.f32 0.0, %v896
      %v898 = vpop.f32.mrb[0].mxu0
      %899 = vmatprep.mubr.bf16.mxu0 0
      %900 = vmatmul.mubr.bf16.gmra.mrb[0].mxu0 %v791
      %v901 = vpop.f32.mrb[0].mxu0
      %v902 = vadd.f32 0.0, %v901
      %v903 = vpop.f32.mrb[0].mxu0
      %v904 = vpop.f32.mrb[0].mxu0
      %v905 = vadd.f32 0.0, %v904
      %v906 = vpop.f32.mrb[0].mxu0
      %907 = vmatprep.mubr.bf16.mxu0 0
      %908 = vmatmul.mubr.bf16.gmra.mrb[0].mxu0 %v794
      %v909 = vpop.f32.mrb[0].mxu0
      %v910 = vadd.f32 0.0, %v909
      %v911 = vpop.f32.mrb[0].mxu0
      %v912 = vpop.f32.mrb[0].mxu0
      %v913 = vadd.f32 0.0, %v912
      %v914 = vpop.f32.mrb[0].mxu0
      %915 = vmatprep.mubr.bf16.mxu0 0
      %916 = vmatmul.mubr.bf16.gmra.mrb[0].mxu0 %v797
      %v917 = vpop.f32.mrb[0].mxu0
      %v918 = vadd.f32 0.0, %v917
      %v919 = vpop.f32.mrb[0].mxu0
      %v920 = vpop.f32.mrb[0].mxu0
      %v921 = vadd.f32 0.0, %v920
      %v922 = vpop.f32.mrb[0].mxu0
      %923 = vmatprep.mubr.bf16.mxu0 0
      %924 = vmatmul.mubr.bf16.gmra.mrb[0].mxu0 %v800
      %v925 = vpop.f32.mrb[0].mxu0
      %v926 = vadd.f32 0.0, %v925
      %v927 = vpop.f32.mrb[0].mxu0
      %v928 = vpop.f32.mrb[0].mxu0
      %v929 = vadd.f32 0.0, %v928
      %v930 = vpop.f32.mrb[0].mxu0
      %931 = vmatprep.mubr.bf16.mxu0 0
      %932 = vmatmul.mubr.bf16.gmra.mrb[0].mxu0 %v803
      %v933 = vpop.f32.mrb[0].mxu0
      %v934 = vadd.f32 0.0, %v933
      %v935 = vpop.f32.mrb[0].mxu0
      %v936 = vpop.f32.mrb[0].mxu0
      %v937 = vadd.f32 0.0, %v936
      %v938 = vpop.f32.mrb[0].mxu0
      %939 = vmatprep.mubr.bf16.mxu0 0
      %940 = vmatmul.mubr.bf16.gmra.mrb[0].mxu0 %v806
      %v941 = vpop.f32.mrb[0].mxu0
      %v942 = vadd.f32 0.0, %v941
      %v943 = vpop.f32.mrb[0].mxu0
      %v944 = vpop.f32.mrb[0].mxu0
      %v945 = vadd.f32 0.0, %v944
      %v946 = vpop.f32.mrb[0].mxu0
      %947 = vmatprep.mubr.bf16.mxu0 0
      %948 = vmatmul.mubr.bf16.gmra.mrb[0].mxu0 %v809
      %v949 = vpop.f32.mrb[0].mxu0
      %v950 = vadd.f32 0.0, %v949
      %v951 = vpop.f32.mrb[0].mxu0
      %v952 = vpop.f32.mrb[0].mxu0
      %v953 = vadd.f32 0.0, %v952
      %v954 = vpop.f32.mrb[0].mxu0
      %955 = vmatprep.mubr.bf16.mxu0 0
      %956 = vmatmul.mubr.bf16.gmra.mrb[0].mxu0 %v812
      %v957 = vpop.f32.mrb[0].mxu0
      %v958 = vadd.f32 0.0, %v957
      %v959 = vpop.f32.mrb[0].mxu0
      %v960 = vpop.f32.mrb[0].mxu0
      %v961 = vadd.f32 0.0, %v960
      %v962 = vpop.f32.mrb[0].mxu0
      %963 = vmatprep.mubr.bf16.mxu0 0
      %964 = vmatmul.mubr.bf16.gmra.mrb[0].mxu0 %v815
      %v965 = vpop.f32.mrb[0].mxu0
      %v966 = vadd.f32 0.0, %v965
      %v967 = vpop.f32.mrb[0].mxu0
      %v968 = vpop.f32.mrb[0].mxu0
      %v969 = vadd.f32 0.0, %v968
      %v970 = vpop.f32.mrb[0].mxu0
      %971 = vmatprep.mubr.bf16.mxu0 0
      %972 = vmatmul.mubr.bf16.gmra.mrb[0].mxu0 %v818
      %v973 = vpop.f32.mrb[0].mxu0
      %v974 = vadd.f32 0.0, %v973
      %v975 = vpop.f32.mrb[0].mxu0
      %v976 = vpop.f32.mrb[0].mxu0
      %v977 = vadd.f32 0.0, %v976
      %v978 = vpop.f32.mrb[0].mxu0
      %979 = vmatprep.mubr.bf16.mxu0 0
      %980 = vmatmul.mubr.bf16.gmra.mrb[0].mxu0 %v821
      %v981 = vpop.f32.mrb[0].mxu0
      %v982 = vadd.f32 0.0, %v981
      %v983 = vpop.f32.mrb[0].mxu0
      %v984 = vpop.f32.mrb[0].mxu0
      %v985 = vadd.f32 0.0, %v984
      %v986 = vpop.f32.mrb[0].mxu0
      %987 = vdwg.mxu0
      %v991 = vunpack.c.l.b16 %v758
      %v992 = vunpack.c.l.b16 %v759
      %v993 = vunpack.c.l.b16 %v760
      %v994 = vpack.c.b16 %v992, %v991
      %v995 = vpack.c.b16 %v993, %v993
      %v998 = vsel %vm774, 0, 0
      %v1001 = vsel %vm823, %v995, 0
      %1003 = vmatprep.subr.bf16.mxu0 0
      %1004 = vmatpush1.bf16.msra.mxu0 %v994
      %1005 = vmatprep.subr.bf16.mxu0 0
      %1006 = vmatpush1.bf16.msra.mxu0 %v1001
      %1007 = vmatprep.subr.bf16.mxu0 0
      %1008 = vmatpush1.bf16.msra.mxu0 0
      %1009 = vmatprep.subr.bf16.mxu0 0
      %1010 = vmatpush1.bf16.msra.mxu0 0
      %1011 = vmatprep.subr.bf16.mxu0 0
      %1012 = vmatpush1.bf16.msra.mxu0 0
      %1013 = vmatprep.subr.bf16.mxu0 0
      %1014 = vmatpush1.bf16.msra.mxu0 0
      %1015 = vmatprep.subr.bf16.mxu0 0
      %1016 = vmatpush1.bf16.msra.mxu0 0
      %1017 = vmatprep.subr.bf16.mxu0 0
      %1018 = vmatpush1.bf16.msra.mxu0 0
      %1019 = vmatprep.subr.bf16.mxu0 0
      %1020 = vmatpush1.bf16.msra.mxu0 0
      %1021 = vmatprep.subr.bf16.mxu0 0
      %1022 = vmatpush1.bf16.msra.mxu0 0
      %1023 = vmatprep.subr.bf16.mxu0 0
      %1024 = vmatpush1.bf16.msra.mxu0 0
      %1025 = vmatprep.subr.bf16.mxu0 0
      %1026 = vmatpush1.bf16.msra.mxu0 0
      %1027 = vmatprep.subr.bf16.mxu0 0
      %1028 = vmatpush1.bf16.msra.mxu0 0
      %1029 = vmatprep.subr.bf16.mxu0 0
      %1030 = vmatpush1.bf16.msra.mxu0 0
      %1031 = vmatprep.subr.bf16.mxu0 0
      %1032 = vmatpush1.bf16.msra.mxu0 0
      %1033 = vmatprep.subr.bf16.mxu0 0
      %1034 = vmatpush1.bf16.msra.mxu0 0
      %1035 = vmatprep.mubr.bf16.mxu0 0
      %1036 = vmatmul.mubr.bf16.gmra.mrb[0].mxu0 %v998
      %v1037 = vpop.f32.mrb[0].mxu0
      %v1038 = vadd.f32 %v862, %v1037
      %v1039 = vpop.f32.mrb[0].mxu0
      %v1040 = vpop.f32.mrb[0].mxu0
      %v1041 = vadd.f32 %v865, %v1040
      %v1042 = vpop.f32.mrb[0].mxu0
      %1043 = vmatprep.mubr.bf16.mxu0 0
      %1044 = vmatmul.mubr.bf16.gmra.mrb[0].mxu0 %v776
      %v1045 = vpop.f32.mrb[0].mxu0
      %v1046 = vadd.f32 %v870, %v1045
      %v1047 = vpop.f32.mrb[0].mxu0
      %v1048 = vpop.f32.mrb[0].mxu0
      %v1049 = vadd.f32 %v873, %v1048
      %v1050 = vpop.f32.mrb[0].mxu0
      %1051 = vmatprep.mubr.bf16.mxu0 0
      %1052 = vmatmul.mubr.bf16.gmra.mrb[0].mxu0 %v779
      %v1053 = vpop.f32.mrb[0].mxu0
      %v1054 = vadd.f32 %v878, %v1053
      %v1055 = vpop.f32.mrb[0].mxu0
      %v1056 = vpop.f32.mrb[0].mxu0
      %v1057 = vadd.f32 %v881, %v1056
      %v1058 = vpop.f32.mrb[0].mxu0
      %1059 = vmatprep.mubr.bf16.mxu0 0
      %1060 = vmatmul.mubr.bf16.gmra.mrb[0].mxu0 %v782
      %v1061 = vpop.f32.mrb[0].mxu0
      %v1062 = vadd.f32 %v886, %v1061
      %v1063 = vpop.f32.mrb[0].mxu0
      %v1064 = vpop.f32.mrb[0].mxu0
      %v1065 = vadd.f32 %v889, %v1064
      %v1066 = vpop.f32.mrb[0].mxu0
      %1067 = vmatprep.mubr.bf16.mxu0 0
      %1068 = vmatmul.mubr.bf16.gmra.mrb[0].mxu0 %v785
      %v1069 = vpop.f32.mrb[0].mxu0
      %v1070 = vadd.f32 %v894, %v1069
      %v1071 = vpop.f32.mrb[0].mxu0
      %v1072 = vpop.f32.mrb[0].mxu0
      %v1073 = vadd.f32 %v897, %v1072
      %v1074 = vpop.f32.mrb[0].mxu0
      %1075 = vmatprep.mubr.bf16.mxu0 0
      %1076 = vmatmul.mubr.bf16.gmra.mrb[0].mxu0 %v788
      %v1077 = vpop.f32.mrb[0].mxu0
      %v1078 = vadd.f32 %v902, %v1077
      %v1079 = vpop.f32.mrb[0].mxu0
      %v1080 = vpop.f32.mrb[0].mxu0
      %v1081 = vadd.f32 %v905, %v1080
      %v1082 = vpop.f32.mrb[0].mxu0
      %1083 = vmatprep.mubr.bf16.mxu0 0
      %1084 = vmatmul.mubr.bf16.gmra.mrb[0].mxu0 %v791
      %v1085 = vpop.f32.mrb[0].mxu0
      %v1086 = vadd.f32 %v910, %v1085
      %v1087 = vpop.f32.mrb[0].mxu0
      %v1088 = vpop.f32.mrb[0].mxu0
      %v1089 = vadd.f32 %v913, %v1088
      %v1090 = vpop.f32.mrb[0].mxu0
      %1091 = vmatprep.mubr.bf16.mxu0 0
      %1092 = vmatmul.mubr.bf16.gmra.mrb[0].mxu0 %v794
      %v1093 = vpop.f32.mrb[0].mxu0
      %v1094 = vadd.f32 %v918, %v1093
      %v1095 = vpop.f32.mrb[0].mxu0
      %v1096 = vpop.f32.mrb[0].mxu0
      %v1097 = vadd.f32 %v921, %v1096
      %v1098 = vpop.f32.mrb[0].mxu0
      %1099 = vmatprep.mubr.bf16.mxu0 0
      %1100 = vmatmul.mubr.bf16.gmra.mrb[0].mxu0 %v797
      %v1101 = vpop.f32.mrb[0].mxu0
      %v1102 = vadd.f32 %v926, %v1101
      %v1103 = vpop.f32.mrb[0].mxu0
      %v1104 = vpop.f32.mrb[0].mxu0
      %v1105 = vadd.f32 %v929, %v1104
      %v1106 = vpop.f32.mrb[0].mxu0
      %1107 = vmatprep.mubr.bf16.mxu0 0
      %1108 = vmatmul.mubr.bf16.gmra.mrb[0].mxu0 %v800
      %v1109 = vpop.f32.mrb[0].mxu0
      %v1110 = vadd.f32 %v934, %v1109
      %v1111 = vpop.f32.mrb[0].mxu0
      %v1112 = vpop.f32.mrb[0].mxu0
      %v1113 = vadd.f32 %v937, %v1112
      %v1114 = vpop.f32.mrb[0].mxu0
      %1115 = vmatprep.mubr.bf16.mxu0 0
      %1116 = vmatmul.mubr.bf16.gmra.mrb[0].mxu0 %v803
      %v1117 = vpop.f32.mrb[0].mxu0
      %v1118 = vadd.f32 %v942, %v1117
      %v1119 = vpop.f32.mrb[0].mxu0
      %v1120 = vpop.f32.mrb[0].mxu0
      %v1121 = vadd.f32 %v945, %v1120
      %v1122 = vpop.f32.mrb[0].mxu0
      %1123 = vmatprep.mubr.bf16.mxu0 0
      %1124 = vmatmul.mubr.bf16.gmra.mrb[0].mxu0 %v806
      %v1125 = vpop.f32.mrb[0].mxu0
      %v1126 = vadd.f32 %v950, %v1125
      %v1127 = vpop.f32.mrb[0].mxu0
      %v1128 = vpop.f32.mrb[0].mxu0
      %v1129 = vadd.f32 %v953, %v1128
      %v1130 = vpop.f32.mrb[0].mxu0
      %1131 = vmatprep.mubr.bf16.mxu0 0
      %1132 = vmatmul.mubr.bf16.gmra.mrb[0].mxu0 %v809
      %v1133 = vpop.f32.mrb[0].mxu0
      %v1134 = vadd.f32 %v958, %v1133
      %v1135 = vpop.f32.mrb[0].mxu0
      %v1136 = vpop.f32.mrb[0].mxu0
      %v1137 = vadd.f32 %v961, %v1136
      %v1138 = vpop.f32.mrb[0].mxu0
      %1139 = vmatprep.mubr.bf16.mxu0 0
      %1140 = vmatmul.mubr.bf16.gmra.mrb[0].mxu0 %v812
      %v1141 = vpop.f32.mrb[0].mxu0
      %v1142 = vadd.f32 %v966, %v1141
      %v1143 = vpop.f32.mrb[0].mxu0
      %v1144 = vpop.f32.mrb[0].mxu0
      %v1145 = vadd.f32 %v969, %v1144
      %v1146 = vpop.f32.mrb[0].mxu0
      %1147 = vmatprep.mubr.bf16.mxu0 0
      %1148 = vmatmul.mubr.bf16.gmra.mrb[0].mxu0 %v815
      %v1149 = vpop.f32.mrb[0].mxu0
      %v1150 = vadd.f32 %v974, %v1149
      %v1151 = vpop.f32.mrb[0].mxu0
      %v1152 = vpop.f32.mrb[0].mxu0
      %v1153 = vadd.f32 %v977, %v1152
      %v1154 = vpop.f32.mrb[0].mxu0
      %1155 = vmatprep.mubr.bf16.mxu0 0
      %1156 = vmatmul.mubr.bf16.gmra.mrb[0].mxu0 %v818
      %v1157 = vpop.f32.mrb[0].mxu0
      %v1158 = vadd.f32 %v982, %v1157
      %v1159 = vpop.f32.mrb[0].mxu0
      %v1160 = vpop.f32.mrb[0].mxu0
      %v1161 = vadd.f32 %v985, %v1160
      %v1162 = vpop.f32.mrb[0].mxu0
      %1163 = vdwg.mxu0
      %s1164 = scalar_lea.vmem %s1, 24
      %v1165 = vld [vmem:[%s1164] sm:$0xf]
      %v1166 = vld [vmem:[%s1164 + $0x4] sm:$0xf]
      %v1167 = vld [vmem:[%s1164 + $0x8] sm:$0xf]
      %v1171 = vunpack.c.l.b16 %v1165
      %v1172 = vunpack.c.l.b16 %v1166
      %v1173 = vunpack.c.l.b16 %v1167
      %v1174 = vpack.c.b16 %v1172, %v1171
      %v1175 = vpack.c.b16 %v1173, %v1173
      %v1178 = vsel %vm823, %v1175, 0
      %1180 = vmatprep.subr.bf16.mxu0 0
      %1181 = vmatpush1.bf16.msra.mxu0 %v1174
      %1182 = vmatprep.subr.bf16.mxu0 0
      %1183 = vmatpush1.bf16.msra.mxu0 %v1178
      %1184 = vmatprep.subr.bf16.mxu0 0
      %1185 = vmatpush1.bf16.msra.mxu0 0
      %1186 = vmatprep.subr.bf16.mxu0 0
      %1187 = vmatpush1.bf16.msra.mxu0 0
      %1188 = vmatprep.subr.bf16.mxu0 0
      %1189 = vmatpush1.bf16.msra.mxu0 0
      %1190 = vmatprep.subr.bf16.mxu0 0
      %1191 = vmatpush1.bf16.msra.mxu0 0
      %1192 = vmatprep.subr.bf16.mxu0 0
      %1193 = vmatpush1.bf16.msra.mxu0 0
      %1194 = vmatprep.subr.bf16.mxu0 0
      %1195 = vmatpush1.bf16.msra.mxu0 0
      %1196 = vmatprep.subr.bf16.mxu0 0
      %1197 = vmatpush1.bf16.msra.mxu0 0
      %1198 = vmatprep.subr.bf16.mxu0 0
      %1199 = vmatpush1.bf16.msra.mxu0 0
      %1200 = vmatprep.subr.bf16.mxu0 0
      %1201 = vmatpush1.bf16.msra.mxu0 0
      %1202 = vmatprep.subr.bf16.mxu0 0
      %1203 = vmatpush1.bf16.msra.mxu0 0
      %1204 = vmatprep.subr.bf16.mxu0 0
      %1205 = vmatpush1.bf16.msra.mxu0 0
      %1206 = vmatprep.subr.bf16.mxu0 0
      %1207 = vmatpush1.bf16.msra.mxu0 0
      %1208 = vmatprep.subr.bf16.mxu0 0
      %1209 = vmatpush1.bf16.msra.mxu0 0
      %1210 = vmatprep.subr.bf16.mxu0 0
      %1211 = vmatpush1.bf16.msra.mxu0 0
      %1212 = vmatprep.mubr.bf16.mxu0 0
      %1213 = vmatmul.mubr.bf16.gmra.mrb[0].mxu0 %v779
      %v1214 = vpop.f32.mrb[0].mxu0
      %v1215 = vadd.f32 0.0, %v1214
      %v1216 = vpop.f32.mrb[0].mxu0
      %v1217 = vpop.f32.mrb[0].mxu0
      %v1218 = vadd.f32 0.0, %v1217
      %v1219 = vpop.f32.mrb[0].mxu0
      %1220 = vmatprep.mubr.bf16.mxu0 0
      %1221 = vmatmul.mubr.bf16.gmra.mrb[0].mxu0 %v782
      %v1222 = vpop.f32.mrb[0].mxu0
      %v1223 = vadd.f32 0.0, %v1222
      %v1224 = vpop.f32.mrb[0].mxu0
      %v1225 = vpop.f32.mrb[0].mxu0
      %v1226 = vadd.f32 0.0, %v1225
      %v1227 = vpop.f32.mrb[0].mxu0
      %1228 = vmatprep.mubr.bf16.mxu0 0
      %1229 = vmatmul.mubr.bf16.gmra.mrb[0].mxu0 %v785
      %v1230 = vpop.f32.mrb[0].mxu0
      %v1231 = vadd.f32 0.0, %v1230
      %v1232 = vpop.f32.mrb[0].mxu0
      %v1233 = vpop.f32.mrb[0].mxu0
      %v1234 = vadd.f32 0.0, %v1233
      %v1235 = vpop.f32.mrb[0].mxu0
      %1236 = vmatprep.mubr.bf16.mxu0 0
      %1237 = vmatmul.mubr.bf16.gmra.mrb[0].mxu0 %v788
      %v1238 = vpop.f32.mrb[0].mxu0
      %v1239 = vadd.f32 0.0, %v1238
      %v1240 = vpop.f32.mrb[0].mxu0
      %v1241 = vpop.f32.mrb[0].mxu0
      %v1242 = vadd.f32 0.0, %v1241
      %v1243 = vpop.f32.mrb[0].mxu0
      %1244 = vmatprep.mubr.bf16.mxu0 0
      %1245 = vmatmul.mubr.bf16.gmra.mrb[0].mxu0 %v791
      %v1246 = vpop.f32.mrb[0].mxu0
      %v1247 = vadd.f32 0.0, %v1246
      %v1248 = vpop.f32.mrb[0].mxu0
      %v1249 = vpop.f32.mrb[0].mxu0
      %v1250 = vadd.f32 0.0, %v1249
      %v1251 = vpop.f32.mrb[0].mxu0
      %1252 = vmatprep.mubr.bf16.mxu0 0
      %1253 = vmatmul.mubr.bf16.gmra.mrb[0].mxu0 %v794
      %v1254 = vpop.f32.mrb[0].mxu0
      %v1255 = vadd.f32 0.0, %v1254
      %v1256 = vpop.f32.mrb[0].mxu0
      %v1257 = vpop.f32.mrb[0].mxu0
      %v1258 = vadd.f32 0.0, %v1257
      %v1259 = vpop.f32.mrb[0].mxu0
      %1260 = vmatprep.mubr.bf16.mxu0 0
      %1261 = vmatmul.mubr.bf16.gmra.mrb[0].mxu0 %v797
      %v1262 = vpop.f32.mrb[0].mxu0
      %v1263 = vadd.f32 0.0, %v1262
      %v1264 = vpop.f32.mrb[0].mxu0
      %v1265 = vpop.f32.mrb[0].mxu0
      %v1266 = vadd.f32 0.0, %v1265
      %v1267 = vpop.f32.mrb[0].mxu0
      %1268 = vmatprep.mubr.bf16.mxu0 0
      %1269 = vmatmul.mubr.bf16.gmra.mrb[0].mxu0 %v800
      %v1270 = vpop.f32.mrb[0].mxu0
      %v1271 = vadd.f32 0.0, %v1270
      %v1272 = vpop.f32.mrb[0].mxu0
      %v1273 = vpop.f32.mrb[0].mxu0
      %v1274 = vadd.f32 0.0, %v1273
      %v1275 = vpop.f32.mrb[0].mxu0
      %1276 = vmatprep.mubr.bf16.mxu0 0
      %1277 = vmatmul.mubr.bf16.gmra.mrb[0].mxu0 %v803
      %v1278 = vpop.f32.mrb[0].mxu0
      %v1279 = vadd.f32 0.0, %v1278
      %v1280 = vpop.f32.mrb[0].mxu0
      %v1281 = vpop.f32.mrb[0].mxu0
      %v1282 = vadd.f32 0.0, %v1281
      %v1283 = vpop.f32.mrb[0].mxu0
      %1284 = vmatprep.mubr.bf16.mxu0 0
      %1285 = vmatmul.mubr.bf16.gmra.mrb[0].mxu0 %v806
      %v1286 = vpop.f32.mrb[0].mxu0
      %v1287 = vadd.f32 0.0, %v1286
      %v1288 = vpop.f32.mrb[0].mxu0
      %v1289 = vpop.f32.mrb[0].mxu0
      %v1290 = vadd.f32 0.0, %v1289
      %v1291 = vpop.f32.mrb[0].mxu0
      %1292 = vmatprep.mubr.bf16.mxu0 0
      %1293 = vmatmul.mubr.bf16.gmra.mrb[0].mxu0 %v809
      %v1294 = vpop.f32.mrb[0].mxu0
      %v1295 = vadd.f32 0.0, %v1294
      %v1296 = vpop.f32.mrb[0].mxu0
      %v1297 = vpop.f32.mrb[0].mxu0
      %v1298 = vadd.f32 0.0, %v1297
      %v1299 = vpop.f32.mrb[0].mxu0
      %1300 = vmatprep.mubr.bf16.mxu0 0
      %1301 = vmatmul.mubr.bf16.gmra.mrb[0].mxu0 %v812
      %v1302 = vpop.f32.mrb[0].mxu0
      %v1303 = vadd.f32 0.0, %v1302
      %v1304 = vpop.f32.mrb[0].mxu0
      %v1305 = vpop.f32.mrb[0].mxu0
      %v1306 = vadd.f32 0.0, %v1305
      %v1307 = vpop.f32.mrb[0].mxu0
      %1308 = vmatprep.mubr.bf16.mxu0 0
      %1309 = vmatmul.mubr.bf16.gmra.mrb[0].mxu0 %v815
      %v1310 = vpop.f32.mrb[0].mxu0
      %v1311 = vadd.f32 0.0, %v1310
      %v1312 = vpop.f32.mrb[0].mxu0
      %v1313 = vpop.f32.mrb[0].mxu0
      %v1314 = vadd.f32 0.0, %v1313
      %v1315 = vpop.f32.mrb[0].mxu0
      %1316 = vmatprep.mubr.bf16.mxu0 0
      %1317 = vmatmul.mubr.bf16.gmra.mrb[0].mxu0 %v818
      %v1318 = vpop.f32.mrb[0].mxu0
      %v1319 = vadd.f32 0.0, %v1318
      %v1320 = vpop.f32.mrb[0].mxu0
      %v1321 = vpop.f32.mrb[0].mxu0
      %v1322 = vadd.f32 0.0, %v1321
      %v1323 = vpop.f32.mrb[0].mxu0
      %1324 = vmatprep.mubr.bf16.mxu0 0
      %1325 = vmatmul.mubr.bf16.gmra.mrb[0].mxu0 %v821
      %v1326 = vpop.f32.mrb[0].mxu0
      %v1327 = vadd.f32 0.0, %v1326
      %v1328 = vpop.f32.mrb[0].mxu0
      %v1329 = vpop.f32.mrb[0].mxu0
      %v1330 = vadd.f32 0.0, %v1329
      %v1331 = vpop.f32.mrb[0].mxu0
      %1332 = vmatprep.mubr.bf16.mxu0 0
      %1333 = vmatmul.mubr.bf16.gmra.mrb[0].mxu0 %v998
      %v1334 = vpop.f32.mrb[0].mxu0
      %v1335 = vadd.f32 0.0, %v1334
      %v1336 = vpop.f32.mrb[0].mxu0
      %v1337 = vpop.f32.mrb[0].mxu0
      %v1338 = vadd.f32 0.0, %v1337
      %v1339 = vpop.f32.mrb[0].mxu0
      %1340 = vdwg.mxu0
      %v1341 = vadd.f32 %v1038, %v1215
      %v1342 = vadd.f32 %v1041, %v1218
      %v1343 = vadd.f32 %v1046, %v1223
      %v1344 = vadd.f32 %v1049, %v1226
      %v1345 = vadd.f32 %v1054, %v1231
      %v1346 = vadd.f32 %v1057, %v1234
      %v1347 = vadd.f32 %v1062, %v1239
      %v1348 = vadd.f32 %v1065, %v1242
      %v1349 = vadd.f32 %v1070, %v1247
      %v1350 = vadd.f32 %v1073, %v1250
      %v1351 = vadd.f32 %v1078, %v1255
      %v1352 = vadd.f32 %v1081, %v1258
      %v1353 = vadd.f32 %v1086, %v1263
      %v1354 = vadd.f32 %v1089, %v1266
      %v1355 = vadd.f32 %v1094, %v1271
      %v1356 = vadd.f32 %v1097, %v1274
      %v1357 = vadd.f32 %v1102, %v1279
      %v1358 = vadd.f32 %v1105, %v1282
      %v1359 = vadd.f32 %v1110, %v1287
      %v1360 = vadd.f32 %v1113, %v1290
      %v1361 = vadd.f32 %v1118, %v1295
      %v1362 = vadd.f32 %v1121, %v1298
      %v1363 = vadd.f32 %v1126, %v1303
      %v1364 = vadd.f32 %v1129, %v1306
      %v1365 = vadd.f32 %v1134, %v1311
      %v1366 = vadd.f32 %v1137, %v1314
      %v1367 = vadd.f32 %v1142, %v1319
      %v1368 = vadd.f32 %v1145, %v1322
      %v1369 = vadd.f32 %v1150, %v1327
      %v1370 = vadd.f32 %v1153, %v1330
      %v1371 = vadd.f32 %v1158, %v1335
      %v1372 = vadd.f32 %v1161, %v1338
      %v1373 = vld [vmem:[%s2] sm:$0x1]
      %v1375 = vlaneseq
      %v1376 = vshrl.u32 %v1375, 7
      %v1377 = vsub.s32 0, %v1376
      %v1378 = vrot.slane %v1373, %v1377
      %v1380 = vadd.f32 %v1341, %v1378
      %v1381 = vadd.f32 %v1342, %v1378
      %v1382 = vadd.f32 %v1343, %v1378
      %v1383 = vadd.f32 %v1344, %v1378
      %v1384 = vadd.f32 %v1345, %v1378
      %v1385 = vadd.f32 %v1346, %v1378
      %v1386 = vadd.f32 %v1347, %v1378
      %v1387 = vadd.f32 %v1348, %v1378
      %v1388 = vadd.f32 %v1349, %v1378
      %v1389 = vadd.f32 %v1350, %v1378
      %v1390 = vadd.f32 %v1351, %v1378
      %v1391 = vadd.f32 %v1352, %v1378
      %v1392 = vadd.f32 %v1353, %v1378
      %v1393 = vadd.f32 %v1354, %v1378
      %v1394 = vadd.f32 %v1355, %v1378
      %v1395 = vadd.f32 %v1356, %v1378
      %v1396 = vadd.f32 %v1357, %v1378
      %v1397 = vadd.f32 %v1358, %v1378
      %v1398 = vadd.f32 %v1359, %v1378
      %v1399 = vadd.f32 %v1360, %v1378
      %v1400 = vadd.f32 %v1361, %v1378
      %v1401 = vadd.f32 %v1362, %v1378
      %v1402 = vadd.f32 %v1363, %v1378
      %v1403 = vadd.f32 %v1364, %v1378
      %v1404 = vadd.f32 %v1365, %v1378
      %v1405 = vadd.f32 %v1366, %v1378
      %v1406 = vadd.f32 %v1367, %v1378
      %v1407 = vadd.f32 %v1368, %v1378
      %v1408 = vadd.f32 %v1369, %v1378
      %v1409 = vadd.f32 %v1370, %v1378
      %v1410 = vadd.f32 %v1371, %v1378
      %v1411 = vadd.f32 %v1372, %v1378
      %v1412 = vmax.f32 %v1380, 0.0
      %v1413 = vmax.f32 %v1381, 0.0
      %v1414 = vmax.f32 %v1382, 0.0
      %v1415 = vmax.f32 %v1383, 0.0
      %v1416 = vmax.f32 %v1384, 0.0
      %v1417 = vmax.f32 %v1385, 0.0
      %v1418 = vmax.f32 %v1386, 0.0
      %v1419 = vmax.f32 %v1387, 0.0
      %v1420 = vmax.f32 %v1388, 0.0
      %v1421 = vmax.f32 %v1389, 0.0
      %v1422 = vmax.f32 %v1390, 0.0
      %v1423 = vmax.f32 %v1391, 0.0
      %v1424 = vmax.f32 %v1392, 0.0
      %v1425 = vmax.f32 %v1393, 0.0
      %v1426 = vmax.f32 %v1394, 0.0
      %v1427 = vmax.f32 %v1395, 0.0
      %v1428 = vmax.f32 %v1396, 0.0
      %v1429 = vmax.f32 %v1397, 0.0
      %v1430 = vmax.f32 %v1398, 0.0
      %v1431 = vmax.f32 %v1399, 0.0
      %v1432 = vmax.f32 %v1400, 0.0
      %v1433 = vmax.f32 %v1401, 0.0
      %v1434 = vmax.f32 %v1402, 0.0
      %v1435 = vmax.f32 %v1403, 0.0
      %v1436 = vmax.f32 %v1404, 0.0
      %v1437 = vmax.f32 %v1405, 0.0
      %v1438 = vmax.f32 %v1406, 0.0
      %v1439 = vmax.f32 %v1407, 0.0
      %v1440 = vmax.f32 %v1408, 0.0
      %v1441 = vmax.f32 %v1409, 0.0
      %v1442 = vmax.f32 %v1410, 0.0
      %v1443 = vmax.f32 %v1411, 0.0
      %v1476 = vrot.slane %v1412, 7
      %v1477 = vrot.slane %v1413, 7
      %v1478 = vsel %vm290, %v1476, %v1477
      %v1479 = vrot.slane %v1414, 7
      %v1480 = vrot.slane %v1415, 7
      %v1481 = vsel %vm290, %v1479, %v1480
      %v1482 = vrot.slane %v1416, 7
      %v1483 = vrot.slane %v1417, 7
      %v1484 = vsel %vm290, %v1482, %v1483
      %v1485 = vrot.slane %v1418, 7
      %v1486 = vrot.slane %v1419, 7
      %v1487 = vsel %vm290, %v1485, %v1486
      %v1488 = vrot.slane %v1420, 7
      %v1489 = vrot.slane %v1421, 7
      %v1490 = vsel %vm290, %v1488, %v1489
      %v1491 = vrot.slane %v1422, 7
      %v1492 = vrot.slane %v1423, 7
      %v1493 = vsel %vm290, %v1491, %v1492
      %v1494 = vrot.slane %v1424, 7
      %v1495 = vrot.slane %v1425, 7
      %v1496 = vsel %vm290, %v1494, %v1495
      %v1497 = vrot.slane %v1426, 7
      %v1498 = vrot.slane %v1427, 7
      %v1499 = vsel %vm290, %v1497, %v1498
      %v1500 = vrot.slane %v1428, 7
      %v1501 = vrot.slane %v1429, 7
      %v1502 = vsel %vm290, %v1500, %v1501
      %v1503 = vrot.slane %v1430, 7
      %v1504 = vrot.slane %v1431, 7
      %v1505 = vsel %vm290, %v1503, %v1504
      %v1506 = vrot.slane %v1432, 7
      %v1507 = vrot.slane %v1433, 7
      %v1508 = vsel %vm290, %v1506, %v1507
      %v1509 = vrot.slane %v1434, 7
      %v1510 = vrot.slane %v1435, 7
      %v1511 = vsel %vm290, %v1509, %v1510
      %v1512 = vrot.slane %v1436, 7
      %v1513 = vrot.slane %v1437, 7
      %v1514 = vsel %vm290, %v1512, %v1513
      %v1515 = vrot.slane %v1438, 7
      %v1516 = vrot.slane %v1439, 7
      %v1517 = vsel %vm290, %v1515, %v1516
      %v1518 = vrot.slane %v1440, 7
      %v1519 = vrot.slane %v1441, 7
      %v1520 = vsel %vm290, %v1518, %v1519
      %v1521 = vrot.slane %v1442, 7
      %v1522 = vrot.slane %v1443, 7
      %v1523 = vsel %vm290, %v1521, %v1522
      %v1556 = vsel %vm290, 0.0, %v1476
      %v1557 = vsel %vm290, 0.0, %v1479
      %v1558 = vsel %vm290, 0.0, %v1482
      %v1559 = vsel %vm290, 0.0, %v1485
      %v1560 = vsel %vm290, 0.0, %v1488
      %v1561 = vsel %vm290, 0.0, %v1491
      %v1562 = vsel %vm290, 0.0, %v1494
      %v1563 = vsel %vm290, 0.0, %v1497
      %v1564 = vsel %vm290, 0.0, %v1500
      %v1565 = vsel %vm290, 0.0, %v1503
      %v1566 = vsel %vm290, 0.0, %v1506
      %v1567 = vsel %vm290, 0.0, %v1509
      %v1568 = vsel %vm290, 0.0, %v1512
      %v1569 = vsel %vm290, 0.0, %v1515
      %v1570 = vsel %vm290, 0.0, %v1518
      %v1571 = vsel %vm290, 0.0, %v1521
      %v1572 = vrot.slane %v1412, 1
      %v1573 = vrot.slane %v1413, 1
      %v1574 = vsel %vm387, %v1572, %v1573
      %v1575 = vrot.slane %v1414, 1
      %v1576 = vrot.slane %v1415, 1
      %v1577 = vsel %vm387, %v1575, %v1576
      %v1578 = vrot.slane %v1416, 1
      %v1579 = vrot.slane %v1417, 1
      %v1580 = vsel %vm387, %v1578, %v1579
      %v1581 = vrot.slane %v1418, 1
      %v1582 = vrot.slane %v1419, 1
      %v1583 = vsel %vm387, %v1581, %v1582
      %v1584 = vrot.slane %v1420, 1
      %v1585 = vrot.slane %v1421, 1
      %v1586 = vsel %vm387, %v1584, %v1585
      %v1587 = vrot.slane %v1422, 1
      %v1588 = vrot.slane %v1423, 1
      %v1589 = vsel %vm387, %v1587, %v1588
      %v1590 = vrot.slane %v1424, 1
      %v1591 = vrot.slane %v1425, 1
      %v1592 = vsel %vm387, %v1590, %v1591
      %v1593 = vrot.slane %v1426, 1
      %v1594 = vrot.slane %v1427, 1
      %v1595 = vsel %vm387, %v1593, %v1594
      %v1596 = vrot.slane %v1428, 1
      %v1597 = vrot.slane %v1429, 1
      %v1598 = vsel %vm387, %v1596, %v1597
      %v1599 = vrot.slane %v1430, 1
      %v1600 = vrot.slane %v1431, 1
      %v1601 = vsel %vm387, %v1599, %v1600
      %v1602 = vrot.slane %v1432, 1
      %v1603 = vrot.slane %v1433, 1
      %v1604 = vsel %vm387, %v1602, %v1603
      %v1605 = vrot.slane %v1434, 1
      %v1606 = vrot.slane %v1435, 1
      %v1607 = vsel %vm387, %v1605, %v1606
      %v1608 = vrot.slane %v1436, 1
      %v1609 = vrot.slane %v1437, 1
      %v1610 = vsel %vm387, %v1608, %v1609
      %v1611 = vrot.slane %v1438, 1
      %v1612 = vrot.slane %v1439, 1
      %v1613 = vsel %vm387, %v1611, %v1612
      %v1614 = vrot.slane %v1440, 1
      %v1615 = vrot.slane %v1441, 1
      %v1616 = vsel %vm387, %v1614, %v1615
      %v1617 = vrot.slane %v1442, 1
      %v1618 = vrot.slane %v1443, 1
      %v1619 = vsel %vm387, %v1617, %v1618
      %v1636 = vsel %vm387, %v1573, 0.0
      %v1637 = vsel %vm387, %v1576, 0.0
      %v1638 = vsel %vm387, %v1579, 0.0
      %v1639 = vsel %vm387, %v1582, 0.0
      %v1640 = vsel %vm387, %v1585, 0.0
      %v1641 = vsel %vm387, %v1588, 0.0
      %v1642 = vsel %vm387, %v1591, 0.0
      %v1643 = vsel %vm387, %v1594, 0.0
      %v1644 = vsel %vm387, %v1597, 0.0
      %v1645 = vsel %vm387, %v1600, 0.0
      %v1646 = vsel %vm387, %v1603, 0.0
      %v1647 = vsel %vm387, %v1606, 0.0
      %v1648 = vsel %vm387, %v1609, 0.0
      %v1649 = vsel %vm387, %v1612, 0.0
      %v1650 = vsel %vm387, %v1615, 0.0
      %v1651 = vsel %vm387, %v1618, 0.0
      %1652 = vrot.lane.b32.xlu0 %v1412, 8
      %v1653 = vpop.permute.xlu0 %1652
      %1654 = vrot.lane.b32.xlu0 %v1413, 8
      %v1655 = vpop.permute.xlu0 %1654
      %1656 = vrot.lane.b32.xlu0 %v1414, 8
      %v1657 = vpop.permute.xlu0 %1656
      %1658 = vrot.lane.b32.xlu0 %v1415, 8
      %v1659 = vpop.permute.xlu0 %1658
      %1660 = vrot.lane.b32.xlu0 %v1416, 8
      %v1661 = vpop.permute.xlu0 %1660
      %1662 = vrot.lane.b32.xlu0 %v1417, 8
      %v1663 = vpop.permute.xlu0 %1662
      %1664 = vrot.lane.b32.xlu0 %v1418, 8
      %v1665 = vpop.permute.xlu0 %1664
      %1666 = vrot.lane.b32.xlu0 %v1419, 8
      %v1667 = vpop.permute.xlu0 %1666
      %1668 = vrot.lane.b32.xlu0 %v1420, 8
      %v1669 = vpop.permute.xlu0 %1668
      %1670 = vrot.lane.b32.xlu0 %v1421, 8
      %v1671 = vpop.permute.xlu0 %1670
      %1672 = vrot.lane.b32.xlu0 %v1422, 8
      %v1673 = vpop.permute.xlu0 %1672
      %1674 = vrot.lane.b32.xlu0 %v1423, 8
      %v1675 = vpop.permute.xlu0 %1674
      %1676 = vrot.lane.b32.xlu0 %v1424, 8
      %v1677 = vpop.permute.xlu0 %1676
      %1678 = vrot.lane.b32.xlu0 %v1425, 8
      %v1679 = vpop.permute.xlu0 %1678
      %1680 = vrot.lane.b32.xlu0 %v1426, 8
      %v1681 = vpop.permute.xlu0 %1680
      %1682 = vrot.lane.b32.xlu0 %v1427, 8
      %v1683 = vpop.permute.xlu0 %1682
      %1684 = vrot.lane.b32.xlu0 %v1428, 8
      %v1685 = vpop.permute.xlu0 %1684
      %1686 = vrot.lane.b32.xlu0 %v1429, 8
      %v1687 = vpop.permute.xlu0 %1686
      %1688 = vrot.lane.b32.xlu0 %v1430, 8
      %v1689 = vpop.permute.xlu0 %1688
      %1690 = vrot.lane.b32.xlu0 %v1431, 8
      %v1691 = vpop.permute.xlu0 %1690
      %1692 = vrot.lane.b32.xlu0 %v1432, 8
      %v1693 = vpop.permute.xlu0 %1692
      %1694 = vrot.lane.b32.xlu0 %v1433, 8
      %v1695 = vpop.permute.xlu0 %1694
      %1696 = vrot.lane.b32.xlu0 %v1434, 8
      %v1697 = vpop.permute.xlu0 %1696
      %1698 = vrot.lane.b32.xlu0 %v1435, 8
      %v1699 = vpop.permute.xlu0 %1698
      %1700 = vrot.lane.b32.xlu0 %v1436, 8
      %v1701 = vpop.permute.xlu0 %1700
      %1702 = vrot.lane.b32.xlu0 %v1437, 8
      %v1703 = vpop.permute.xlu0 %1702
      %1704 = vrot.lane.b32.xlu0 %v1438, 8
      %v1705 = vpop.permute.xlu0 %1704
      %1706 = vrot.lane.b32.xlu0 %v1439, 8
      %v1707 = vpop.permute.xlu0 %1706
      %1708 = vrot.lane.b32.xlu0 %v1440, 8
      %v1709 = vpop.permute.xlu0 %1708
      %1710 = vrot.lane.b32.xlu0 %v1441, 8
      %v1711 = vpop.permute.xlu0 %1710
      %1712 = vrot.lane.b32.xlu0 %v1442, 8
      %v1713 = vpop.permute.xlu0 %1712
      %1714 = vrot.lane.b32.xlu0 %v1443, 8
      %v1715 = vpop.permute.xlu0 %1714
      %1764 = vrot.lane.b32.xlu0 %v1574, 16
      %v1765 = vpop.permute.xlu0 %1764
      %1766 = vrot.lane.b32.xlu0 %v1636, 16
      %v1767 = vpop.permute.xlu0 %1766
      %1768 = vrot.lane.b32.xlu0 %v1577, 16
      %v1769 = vpop.permute.xlu0 %1768
      %1770 = vrot.lane.b32.xlu0 %v1637, 16
      %v1771 = vpop.permute.xlu0 %1770
      %1772 = vrot.lane.b32.xlu0 %v1580, 16
      %v1773 = vpop.permute.xlu0 %1772
      %1774 = vrot.lane.b32.xlu0 %v1638, 16
      %v1775 = vpop.permute.xlu0 %1774
      %1776 = vrot.lane.b32.xlu0 %v1583, 16
      %v1777 = vpop.permute.xlu0 %1776
      %1778 = vrot.lane.b32.xlu0 %v1639, 16
      %v1779 = vpop.permute.xlu0 %1778
      %1780 = vrot.lane.b32.xlu0 %v1586, 16
      %v1781 = vpop.permute.xlu0 %1780
      %1782 = vrot.lane.b32.xlu0 %v1640, 16
      %v1783 = vpop.permute.xlu0 %1782
      %1784 = vrot.lane.b32.xlu0 %v1589, 16
      %v1785 = vpop.permute.xlu0 %1784
      %1786 = vrot.lane.b32.xlu0 %v1641, 16
      %v1787 = vpop.permute.xlu0 %1786
      %1788 = vrot.lane.b32.xlu0 %v1592, 16
      %v1789 = vpop.permute.xlu0 %1788
      %1790 = vrot.lane.b32.xlu0 %v1642, 16
      %v1791 = vpop.permute.xlu0 %1790
      %1792 = vrot.lane.b32.xlu0 %v1595, 16
      %v1793 = vpop.permute.xlu0 %1792
      %1794 = vrot.lane.b32.xlu0 %v1643, 16
      %v1795 = vpop.permute.xlu0 %1794
      %1796 = vrot.lane.b32.xlu0 %v1598, 16
      %v1797 = vpop.permute.xlu0 %1796
      %1798 = vrot.lane.b32.xlu0 %v1644, 16
      %v1799 = vpop.permute.xlu0 %1798
      %1800 = vrot.lane.b32.xlu0 %v1601, 16
      %v1801 = vpop.permute.xlu0 %1800
      %1802 = vrot.lane.b32.xlu0 %v1645, 16
      %v1803 = vpop.permute.xlu0 %1802
      %1804 = vrot.lane.b32.xlu0 %v1604, 16
      %v1805 = vpop.permute.xlu0 %1804
      %1806 = vrot.lane.b32.xlu0 %v1646, 16
      %v1807 = vpop.permute.xlu0 %1806
      %1808 = vrot.lane.b32.xlu0 %v1607, 16
      %v1809 = vpop.permute.xlu0 %1808
      %1810 = vrot.lane.b32.xlu0 %v1647, 16
      %v1811 = vpop.permute.xlu0 %1810
      %1812 = vrot.lane.b32.xlu0 %v1610, 16
      %v1813 = vpop.permute.xlu0 %1812
      %1814 = vrot.lane.b32.xlu0 %v1648, 16
      %v1815 = vpop.permute.xlu0 %1814
      %1816 = vrot.lane.b32.xlu0 %v1613, 16
      %v1817 = vpop.permute.xlu0 %1816
      %1818 = vrot.lane.b32.xlu0 %v1649, 16
      %v1819 = vpop.permute.xlu0 %1818
      %1820 = vrot.lane.b32.xlu0 %v1616, 16
      %v1821 = vpop.permute.xlu0 %1820
      %1822 = vrot.lane.b32.xlu0 %v1650, 16
      %v1823 = vpop.permute.xlu0 %1822
      %1824 = vrot.lane.b32.xlu0 %v1619, 16
      %v1825 = vpop.permute.xlu0 %1824
      %1826 = vrot.lane.b32.xlu0 %v1651, 16
      %v1827 = vpop.permute.xlu0 %1826
      %v1860 = vsel %vm676, %v1556, %v1653
      %v1861 = vsel %vm676, %v1478, %v1655
      %v1862 = vsel %vm676, %v1557, %v1657
      %v1863 = vsel %vm676, %v1481, %v1659
      %v1864 = vsel %vm676, %v1558, %v1661
      %v1865 = vsel %vm676, %v1484, %v1663
      %v1866 = vsel %vm676, %v1559, %v1665
      %v1867 = vsel %vm676, %v1487, %v1667
      %v1868 = vsel %vm676, %v1560, %v1669
      %v1869 = vsel %vm676, %v1490, %v1671
      %v1870 = vsel %vm676, %v1561, %v1673
      %v1871 = vsel %vm676, %v1493, %v1675
      %v1872 = vsel %vm676, %v1562, %v1677
      %v1873 = vsel %vm676, %v1496, %v1679
      %v1874 = vsel %vm676, %v1563, %v1681
      %v1875 = vsel %vm676, %v1499, %v1683
      %v1876 = vsel %vm676, %v1564, %v1685
      %v1877 = vsel %vm676, %v1502, %v1687
      %v1878 = vsel %vm676, %v1565, %v1689
      %v1879 = vsel %vm676, %v1505, %v1691
      %v1880 = vsel %vm676, %v1566, %v1693
      %v1881 = vsel %vm676, %v1508, %v1695
      %v1882 = vsel %vm676, %v1567, %v1697
      %v1883 = vsel %vm676, %v1511, %v1699
      %v1884 = vsel %vm676, %v1568, %v1701
      %v1885 = vsel %vm676, %v1514, %v1703
      %v1886 = vsel %vm676, %v1569, %v1705
      %v1887 = vsel %vm676, %v1517, %v1707
      %v1888 = vsel %vm676, %v1570, %v1709
      %v1889 = vsel %vm676, %v1520, %v1711
      %v1890 = vsel %vm676, %v1571, %v1713
      %v1891 = vsel %vm676, %v1523, %v1715
      %v1892 = vsel %vm709, %v1860, %v1765
      %v1893 = vsel %vm709, %v1861, %v1767
      %v1894 = vsel %vm709, %v1862, %v1769
      %v1895 = vsel %vm709, %v1863, %v1771
      %v1896 = vsel %vm709, %v1864, %v1773
      %v1897 = vsel %vm709, %v1865, %v1775
      %v1898 = vsel %vm709, %v1866, %v1777
      %v1899 = vsel %vm709, %v1867, %v1779
      %v1900 = vsel %vm709, %v1868, %v1781
      %v1901 = vsel %vm709, %v1869, %v1783
      %v1902 = vsel %vm709, %v1870, %v1785
      %v1903 = vsel %vm709, %v1871, %v1787
      %v1904 = vsel %vm709, %v1872, %v1789
      %v1905 = vsel %vm709, %v1873, %v1791
      %v1906 = vsel %vm709, %v1874, %v1793
      %v1907 = vsel %vm709, %v1875, %v1795
      %v1908 = vsel %vm709, %v1876, %v1797
      %v1909 = vsel %vm709, %v1877, %v1799
      %v1910 = vsel %vm709, %v1878, %v1801
      %v1911 = vsel %vm709, %v1879, %v1803
      %v1912 = vsel %vm709, %v1880, %v1805
      %v1913 = vsel %vm709, %v1881, %v1807
      %v1914 = vsel %vm709, %v1882, %v1809
      %v1915 = vsel %vm709, %v1883, %v1811
      %v1916 = vsel %vm709, %v1884, %v1813
      %v1917 = vsel %vm709, %v1885, %v1815
      %v1918 = vsel %vm709, %v1886, %v1817
      %v1919 = vsel %vm709, %v1887, %v1819
      %v1920 = vsel %vm709, %v1888, %v1821
      %v1921 = vsel %vm709, %v1889, %v1823
      %v1922 = vsel %vm709, %v1890, %v1825
      %v1923 = vsel %vm709, %v1891, %v1827
      %v1924 = vpack.c.bf16 %v1893, %v1892
      %v1925 = vpack.c.bf16 %v1895, %v1894
      %v1926 = vpack.c.bf16 %v1897, %v1896
      %v1927 = vpack.c.bf16 %v1899, %v1898
      %v1928 = vpack.c.bf16 %v1901, %v1900
      %v1929 = vpack.c.bf16 %v1903, %v1902
      %v1930 = vpack.c.bf16 %v1905, %v1904
      %v1931 = vpack.c.bf16 %v1907, %v1906
      %v1932 = vpack.c.bf16 %v1909, %v1908
      %v1933 = vpack.c.bf16 %v1911, %v1910
      %v1934 = vpack.c.bf16 %v1913, %v1912
      %v1935 = vpack.c.bf16 %v1915, %v1914
      %v1936 = vpack.c.bf16 %v1917, %v1916
      %v1937 = vpack.c.bf16 %v1919, %v1918
      %v1938 = vpack.c.bf16 %v1921, %v1920
      %v1939 = vpack.c.bf16 %v1923, %v1922
      %v1940 = vld [vmem:[%s3] sm:$0xf]
      %v1941 = vld [vmem:[%s3 + $0x4] sm:$0xf]
      %v1942 = vld [vmem:[%s3 + $0x8] sm:$0xf]
      %s1943 = scalar_lea.vmem %s3, 12
      %v1944 = vld [vmem:[%s1943] sm:$0xf]
      %v1945 = vld [vmem:[%s1943 + $0x4] sm:$0xf]
      %v1946 = vld [vmem:[%s1943 + $0x8] sm:$0xf]
      %v1950 = vunpack.c.l.b16 %v1944
      %v1951 = vunpack.c.l.b16 %v1945
      %v1952 = vunpack.c.l.b16 %v1946
      %v1953 = vpack.c.b16 %v1951, %v1950
      %v1954 = vpack.c.b16 %v1952, %v1952
      %v1957 = vsel %vm774, %v1924, 0
      %v1960 = vsel %vm774, %v1925, 0
      %v1963 = vsel %vm774, %v1926, 0
      %v1966 = vsel %vm774, %v1927, 0
      %v1969 = vsel %vm774, %v1928, 0
      %v1972 = vsel %vm774, %v1929, 0
      %v1975 = vsel %vm774, %v1930, 0
      %v1978 = vsel %vm774, %v1931, 0
      %v1981 = vsel %vm774, %v1932, 0
      %v1984 = vsel %vm774, %v1933, 0
      %v1987 = vsel %vm774, %v1934, 0
      %v1990 = vsel %vm774, %v1935, 0
      %v1993 = vsel %vm774, %v1936, 0
      %v1996 = vsel %vm774, %v1937, 0
      %v1999 = vsel %vm774, %v1938, 0
      %v2002 = vsel %vm774, %v1939, 0
      %v2005 = vsel %vm823, %v1954, 0
      %2007 = vmatprep.subr.bf16.mxu0 0
      %2008 = vmatpush1.bf16.msra.mxu0 %v1953
      %2009 = vmatprep.subr.bf16.mxu0 0
      %2010 = vmatpush1.bf16.msra.mxu0 %v2005
      %2011 = vmatprep.subr.bf16.mxu0 0
      %2012 = vmatpush1.bf16.msra.mxu0 0
      %2013 = vmatprep.subr.bf16.mxu0 0
      %2014 = vmatpush1.bf16.msra.mxu0 0
      %2015 = vmatprep.subr.bf16.mxu0 0
      %2016 = vmatpush1.bf16.msra.mxu0 0
      %2017 = vmatprep.subr.bf16.mxu0 0
      %2018 = vmatpush1.bf16.msra.mxu0 0
      %2019 = vmatprep.subr.bf16.mxu0 0
      %2020 = vmatpush1.bf16.msra.mxu0 0
      %2021 = vmatprep.subr.bf16.mxu0 0
      %2022 = vmatpush1.bf16.msra.mxu0 0
      %2023 = vmatprep.subr.bf16.mxu0 0
      %2024 = vmatpush1.bf16.msra.mxu0 0
      %2025 = vmatprep.subr.bf16.mxu0 0
      %2026 = vmatpush1.bf16.msra.mxu0 0
      %2027 = vmatprep.subr.bf16.mxu0 0
      %2028 = vmatpush1.bf16.msra.mxu0 0
      %2029 = vmatprep.subr.bf16.mxu0 0
      %2030 = vmatpush1.bf16.msra.mxu0 0
      %2031 = vmatprep.subr.bf16.mxu0 0
      %2032 = vmatpush1.bf16.msra.mxu0 0
      %2033 = vmatprep.subr.bf16.mxu0 0
      %2034 = vmatpush1.bf16.msra.mxu0 0
      %2035 = vmatprep.subr.bf16.mxu0 0
      %2036 = vmatpush1.bf16.msra.mxu0 0
      %2037 = vmatprep.subr.bf16.mxu0 0
      %2038 = vmatpush1.bf16.msra.mxu0 0
      %2039 = vmatprep.mubr.bf16.mxu0 0
      %2040 = vmatmul.mubr.bf16.gmra.mrb[0].mxu0 %v1957
      %v2041 = vpop.f32.mrb[0].mxu0
      %v2042 = vadd.f32 0.0, %v2041
      %v2043 = vpop.f32.mrb[0].mxu0
      %v2044 = vpop.f32.mrb[0].mxu0
      %v2045 = vadd.f32 0.0, %v2044
      %v2046 = vpop.f32.mrb[0].mxu0
      %2047 = vmatprep.mubr.bf16.mxu0 0
      %2048 = vmatmul.mubr.bf16.gmra.mrb[0].mxu0 %v1960
      %v2049 = vpop.f32.mrb[0].mxu0
      %v2050 = vadd.f32 0.0, %v2049
      %v2051 = vpop.f32.mrb[0].mxu0
      %v2052 = vpop.f32.mrb[0].mxu0
      %v2053 = vadd.f32 0.0, %v2052
      %v2054 = vpop.f32.mrb[0].mxu0
      %2055 = vmatprep.mubr.bf16.mxu0 0
      %2056 = vmatmul.mubr.bf16.gmra.mrb[0].mxu0 %v1963
      %v2057 = vpop.f32.mrb[0].mxu0
      %v2058 = vadd.f32 0.0, %v2057
      %v2059 = vpop.f32.mrb[0].mxu0
      %v2060 = vpop.f32.mrb[0].mxu0
      %v2061 = vadd.f32 0.0, %v2060
      %v2062 = vpop.f32.mrb[0].mxu0
      %2063 = vmatprep.mubr.bf16.mxu0 0
      %2064 = vmatmul.mubr.bf16.gmra.mrb[0].mxu0 %v1966
      %v2065 = vpop.f32.mrb[0].mxu0
      %v2066 = vadd.f32 0.0, %v2065
      %v2067 = vpop.f32.mrb[0].mxu0
      %v2068 = vpop.f32.mrb[0].mxu0
      %v2069 = vadd.f32 0.0, %v2068
      %v2070 = vpop.f32.mrb[0].mxu0
      %2071 = vmatprep.mubr.bf16.mxu0 0
      %2072 = vmatmul.mubr.bf16.gmra.mrb[0].mxu0 %v1969
      %v2073 = vpop.f32.mrb[0].mxu0
      %v2074 = vadd.f32 0.0, %v2073
      %v2075 = vpop.f32.mrb[0].mxu0
      %v2076 = vpop.f32.mrb[0].mxu0
      %v2077 = vadd.f32 0.0, %v2076
      %v2078 = vpop.f32.mrb[0].mxu0
      %2079 = vmatprep.mubr.bf16.mxu0 0
      %2080 = vmatmul.mubr.bf16.gmra.mrb[0].mxu0 %v1972
      %v2081 = vpop.f32.mrb[0].mxu0
      %v2082 = vadd.f32 0.0, %v2081
      %v2083 = vpop.f32.mrb[0].mxu0
      %v2084 = vpop.f32.mrb[0].mxu0
      %v2085 = vadd.f32 0.0, %v2084
      %v2086 = vpop.f32.mrb[0].mxu0
      %2087 = vmatprep.mubr.bf16.mxu0 0
      %2088 = vmatmul.mubr.bf16.gmra.mrb[0].mxu0 %v1975
      %v2089 = vpop.f32.mrb[0].mxu0
      %v2090 = vadd.f32 0.0, %v2089
      %v2091 = vpop.f32.mrb[0].mxu0
      %v2092 = vpop.f32.mrb[0].mxu0
      %v2093 = vadd.f32 0.0, %v2092
      %v2094 = vpop.f32.mrb[0].mxu0
      %2095 = vmatprep.mubr.bf16.mxu0 0
      %2096 = vmatmul.mubr.bf16.gmra.mrb[0].mxu0 %v1978
      %v2097 = vpop.f32.mrb[0].mxu0
      %v2098 = vadd.f32 0.0, %v2097
      %v2099 = vpop.f32.mrb[0].mxu0
      %v2100 = vpop.f32.mrb[0].mxu0
      %v2101 = vadd.f32 0.0, %v2100
      %v2102 = vpop.f32.mrb[0].mxu0
      %2103 = vmatprep.mubr.bf16.mxu0 0
      %2104 = vmatmul.mubr.bf16.gmra.mrb[0].mxu0 %v1981
      %v2105 = vpop.f32.mrb[0].mxu0
      %v2106 = vadd.f32 0.0, %v2105
      %v2107 = vpop.f32.mrb[0].mxu0
      %v2108 = vpop.f32.mrb[0].mxu0
      %v2109 = vadd.f32 0.0, %v2108
      %v2110 = vpop.f32.mrb[0].mxu0
      %2111 = vmatprep.mubr.bf16.mxu0 0
      %2112 = vmatmul.mubr.bf16.gmra.mrb[0].mxu0 %v1984
      %v2113 = vpop.f32.mrb[0].mxu0
      %v2114 = vadd.f32 0.0, %v2113
      %v2115 = vpop.f32.mrb[0].mxu0
      %v2116 = vpop.f32.mrb[0].mxu0
      %v2117 = vadd.f32 0.0, %v2116
      %v2118 = vpop.f32.mrb[0].mxu0
      %2119 = vmatprep.mubr.bf16.mxu0 0
      %2120 = vmatmul.mubr.bf16.gmra.mrb[0].mxu0 %v1987
      %v2121 = vpop.f32.mrb[0].mxu0
      %v2122 = vadd.f32 0.0, %v2121
      %v2123 = vpop.f32.mrb[0].mxu0
      %v2124 = vpop.f32.mrb[0].mxu0
      %v2125 = vadd.f32 0.0, %v2124
      %v2126 = vpop.f32.mrb[0].mxu0
      %2127 = vmatprep.mubr.bf16.mxu0 0
      %2128 = vmatmul.mubr.bf16.gmra.mrb[0].mxu0 %v1990
      %v2129 = vpop.f32.mrb[0].mxu0
      %v2130 = vadd.f32 0.0, %v2129
      %v2131 = vpop.f32.mrb[0].mxu0
      %v2132 = vpop.f32.mrb[0].mxu0
      %v2133 = vadd.f32 0.0, %v2132
      %v2134 = vpop.f32.mrb[0].mxu0
      %2135 = vmatprep.mubr.bf16.mxu0 0
      %2136 = vmatmul.mubr.bf16.gmra.mrb[0].mxu0 %v1993
      %v2137 = vpop.f32.mrb[0].mxu0
      %v2138 = vadd.f32 0.0, %v2137
      %v2139 = vpop.f32.mrb[0].mxu0
      %v2140 = vpop.f32.mrb[0].mxu0
      %v2141 = vadd.f32 0.0, %v2140
      %v2142 = vpop.f32.mrb[0].mxu0
      %2143 = vmatprep.mubr.bf16.mxu0 0
      %2144 = vmatmul.mubr.bf16.gmra.mrb[0].mxu0 %v1996
      %v2145 = vpop.f32.mrb[0].mxu0
      %v2146 = vadd.f32 0.0, %v2145
      %v2147 = vpop.f32.mrb[0].mxu0
      %v2148 = vpop.f32.mrb[0].mxu0
      %v2149 = vadd.f32 0.0, %v2148
      %v2150 = vpop.f32.mrb[0].mxu0
      %2151 = vmatprep.mubr.bf16.mxu0 0
      %2152 = vmatmul.mubr.bf16.gmra.mrb[0].mxu0 %v1999
      %v2153 = vpop.f32.mrb[0].mxu0
      %v2154 = vadd.f32 0.0, %v2153
      %v2155 = vpop.f32.mrb[0].mxu0
      %v2156 = vpop.f32.mrb[0].mxu0
      %v2157 = vadd.f32 0.0, %v2156
      %v2158 = vpop.f32.mrb[0].mxu0
      %2159 = vmatprep.mubr.bf16.mxu0 0
      %2160 = vmatmul.mubr.bf16.gmra.mrb[0].mxu0 %v2002
      %v2161 = vpop.f32.mrb[0].mxu0
      %v2162 = vadd.f32 0.0, %v2161
      %v2163 = vpop.f32.mrb[0].mxu0
      %v2164 = vpop.f32.mrb[0].mxu0
      %v2165 = vadd.f32 0.0, %v2164
      %v2166 = vpop.f32.mrb[0].mxu0
      %2167 = vdwg.mxu0
      %v2171 = vunpack.c.l.b16 %v1940
      %v2172 = vunpack.c.l.b16 %v1941
      %v2173 = vunpack.c.l.b16 %v1942
      %v2174 = vpack.c.b16 %v2172, %v2171
      %v2175 = vpack.c.b16 %v2173, %v2173
      %v2178 = vsel %vm823, %v2175, 0
      %2180 = vmatprep.subr.bf16.mxu0 0
      %2181 = vmatpush1.bf16.msra.mxu0 %v2174
      %2182 = vmatprep.subr.bf16.mxu0 0
      %2183 = vmatpush1.bf16.msra.mxu0 %v2178
      %2184 = vmatprep.subr.bf16.mxu0 0
      %2185 = vmatpush1.bf16.msra.mxu0 0
      %2186 = vmatprep.subr.bf16.mxu0 0
      %2187 = vmatpush1.bf16.msra.mxu0 0
      %2188 = vmatprep.subr.bf16.mxu0 0
      %2189 = vmatpush1.bf16.msra.mxu0 0
      %2190 = vmatprep.subr.bf16.mxu0 0
      %2191 = vmatpush1.bf16.msra.mxu0 0
      %2192 = vmatprep.subr.bf16.mxu0 0
      %2193 = vmatpush1.bf16.msra.mxu0 0
      %2194 = vmatprep.subr.bf16.mxu0 0
      %2195 = vmatpush1.bf16.msra.mxu0 0
      %2196 = vmatprep.subr.bf16.mxu0 0
      %2197 = vmatpush1.bf16.msra.mxu0 0
      %2198 = vmatprep.subr.bf16.mxu0 0
      %2199 = vmatpush1.bf16.msra.mxu0 0
      %2200 = vmatprep.subr.bf16.mxu0 0
      %2201 = vmatpush1.bf16.msra.mxu0 0
      %2202 = vmatprep.subr.bf16.mxu0 0
      %2203 = vmatpush1.bf16.msra.mxu0 0
      %2204 = vmatprep.subr.bf16.mxu0 0
      %2205 = vmatpush1.bf16.msra.mxu0 0
      %2206 = vmatprep.subr.bf16.mxu0 0
      %2207 = vmatpush1.bf16.msra.mxu0 0
      %2208 = vmatprep.subr.bf16.mxu0 0
      %2209 = vmatpush1.bf16.msra.mxu0 0
      %2210 = vmatprep.subr.bf16.mxu0 0
      %2211 = vmatpush1.bf16.msra.mxu0 0
      %2212 = vmatprep.mubr.bf16.mxu0 0
      %2213 = vmatmul.mubr.bf16.gmra.mrb[0].mxu0 %v998
      %v2214 = vpop.f32.mrb[0].mxu0
      %v2215 = vadd.f32 %v2042, %v2214
      %v2216 = vpop.f32.mrb[0].mxu0
      %v2217 = vpop.f32.mrb[0].mxu0
      %v2218 = vadd.f32 %v2045, %v2217
      %v2219 = vpop.f32.mrb[0].mxu0
      %2220 = vmatprep.mubr.bf16.mxu0 0
      %2221 = vmatmul.mubr.bf16.gmra.mrb[0].mxu0 %v1957
      %v2222 = vpop.f32.mrb[0].mxu0
      %v2223 = vadd.f32 %v2050, %v2222
      %v2224 = vpop.f32.mrb[0].mxu0
      %v2225 = vpop.f32.mrb[0].mxu0
      %v2226 = vadd.f32 %v2053, %v2225
      %v2227 = vpop.f32.mrb[0].mxu0
      %2228 = vmatprep.mubr.bf16.mxu0 0
      %2229 = vmatmul.mubr.bf16.gmra.mrb[0].mxu0 %v1960
      %v2230 = vpop.f32.mrb[0].mxu0
      %v2231 = vadd.f32 %v2058, %v2230
      %v2232 = vpop.f32.mrb[0].mxu0
      %v2233 = vpop.f32.mrb[0].mxu0
      %v2234 = vadd.f32 %v2061, %v2233
      %v2235 = vpop.f32.mrb[0].mxu0
      %2236 = vmatprep.mubr.bf16.mxu0 0
      %2237 = vmatmul.mubr.bf16.gmra.mrb[0].mxu0 %v1963
      %v2238 = vpop.f32.mrb[0].mxu0
      %v2239 = vadd.f32 %v2066, %v2238
      %v2240 = vpop.f32.mrb[0].mxu0
      %v2241 = vpop.f32.mrb[0].mxu0
      %v2242 = vadd.f32 %v2069, %v2241
      %v2243 = vpop.f32.mrb[0].mxu0
      %2244 = vmatprep.mubr.bf16.mxu0 0
      %2245 = vmatmul.mubr.bf16.gmra.mrb[0].mxu0 %v1966
      %v2246 = vpop.f32.mrb[0].mxu0
      %v2247 = vadd.f32 %v2074, %v2246
      %v2248 = vpop.f32.mrb[0].mxu0
      %v2249 = vpop.f32.mrb[0].mxu0
      %v2250 = vadd.f32 %v2077, %v2249
      %v2251 = vpop.f32.mrb[0].mxu0
      %2252 = vmatprep.mubr.bf16.mxu0 0
      %2253 = vmatmul.mubr.bf16.gmra.mrb[0].mxu0 %v1969
      %v2254 = vpop.f32.mrb[0].mxu0
      %v2255 = vadd.f32 %v2082, %v2254
      %v2256 = vpop.f32.mrb[0].mxu0
      %v2257 = vpop.f32.mrb[0].mxu0
      %v2258 = vadd.f32 %v2085, %v2257
      %v2259 = vpop.f32.mrb[0].mxu0
      %2260 = vmatprep.mubr.bf16.mxu0 0
      %2261 = vmatmul.mubr.bf16.gmra.mrb[0].mxu0 %v1972
      %v2262 = vpop.f32.mrb[0].mxu0
      %v2263 = vadd.f32 %v2090, %v2262
      %v2264 = vpop.f32.mrb[0].mxu0
      %v2265 = vpop.f32.mrb[0].mxu0
      %v2266 = vadd.f32 %v2093, %v2265
      %v2267 = vpop.f32.mrb[0].mxu0
      %2268 = vmatprep.mubr.bf16.mxu0 0
      %2269 = vmatmul.mubr.bf16.gmra.mrb[0].mxu0 %v1975
      %v2270 = vpop.f32.mrb[0].mxu0
      %v2271 = vadd.f32 %v2098, %v2270
      %v2272 = vpop.f32.mrb[0].mxu0
      %v2273 = vpop.f32.mrb[0].mxu0
      %v2274 = vadd.f32 %v2101, %v2273
      %v2275 = vpop.f32.mrb[0].mxu0
      %2276 = vmatprep.mubr.bf16.mxu0 0
      %2277 = vmatmul.mubr.bf16.gmra.mrb[0].mxu0 %v1978
      %v2278 = vpop.f32.mrb[0].mxu0
      %v2279 = vadd.f32 %v2106, %v2278
      %v2280 = vpop.f32.mrb[0].mxu0
      %v2281 = vpop.f32.mrb[0].mxu0
      %v2282 = vadd.f32 %v2109, %v2281
      %v2283 = vpop.f32.mrb[0].mxu0
      %2284 = vmatprep.mubr.bf16.mxu0 0
      %2285 = vmatmul.mubr.bf16.gmra.mrb[0].mxu0 %v1981
      %v2286 = vpop.f32.mrb[0].mxu0
      %v2287 = vadd.f32 %v2114, %v2286
      %v2288 = vpop.f32.mrb[0].mxu0
      %v2289 = vpop.f32.mrb[0].mxu0
      %v2290 = vadd.f32 %v2117, %v2289
      %v2291 = vpop.f32.mrb[0].mxu0
      %2292 = vmatprep.mubr.bf16.mxu0 0
      %2293 = vmatmul.mubr.bf16.gmra.mrb[0].mxu0 %v1984
      %v2294 = vpop.f32.mrb[0].mxu0
      %v2295 = vadd.f32 %v2122, %v2294
      %v2296 = vpop.f32.mrb[0].mxu0
      %v2297 = vpop.f32.mrb[0].mxu0
      %v2298 = vadd.f32 %v2125, %v2297
      %v2299 = vpop.f32.mrb[0].mxu0
      %2300 = vmatprep.mubr.bf16.mxu0 0
      %2301 = vmatmul.mubr.bf16.gmra.mrb[0].mxu0 %v1987
      %v2302 = vpop.f32.mrb[0].mxu0
      %v2303 = vadd.f32 %v2130, %v2302
      %v2304 = vpop.f32.mrb[0].mxu0
      %v2305 = vpop.f32.mrb[0].mxu0
      %v2306 = vadd.f32 %v2133, %v2305
      %v2307 = vpop.f32.mrb[0].mxu0
      %2308 = vmatprep.mubr.bf16.mxu0 0
      %2309 = vmatmul.mubr.bf16.gmra.mrb[0].mxu0 %v1990
      %v2310 = vpop.f32.mrb[0].mxu0
      %v2311 = vadd.f32 %v2138, %v2310
      %v2312 = vpop.f32.mrb[0].mxu0
      %v2313 = vpop.f32.mrb[0].mxu0
      %v2314 = vadd.f32 %v2141, %v2313
      %v2315 = vpop.f32.mrb[0].mxu0
      %2316 = vmatprep.mubr.bf16.mxu0 0
      %2317 = vmatmul.mubr.bf16.gmra.mrb[0].mxu0 %v1993
      %v2318 = vpop.f32.mrb[0].mxu0
      %v2319 = vadd.f32 %v2146, %v2318
      %v2320 = vpop.f32.mrb[0].mxu0
      %v2321 = vpop.f32.mrb[0].mxu0
      %v2322 = vadd.f32 %v2149, %v2321
      %v2323 = vpop.f32.mrb[0].mxu0
      %2324 = vmatprep.mubr.bf16.mxu0 0
      %2325 = vmatmul.mubr.bf16.gmra.mrb[0].mxu0 %v1996
      %v2326 = vpop.f32.mrb[0].mxu0
      %v2327 = vadd.f32 %v2154, %v2326
      %v2328 = vpop.f32.mrb[0].mxu0
      %v2329 = vpop.f32.mrb[0].mxu0
      %v2330 = vadd.f32 %v2157, %v2329
      %v2331 = vpop.f32.mrb[0].mxu0
      %2332 = vmatprep.mubr.bf16.mxu0 0
      %2333 = vmatmul.mubr.bf16.gmra.mrb[0].mxu0 %v1999
      %v2334 = vpop.f32.mrb[0].mxu0
      %v2335 = vadd.f32 %v2162, %v2334
      %v2336 = vpop.f32.mrb[0].mxu0
      %v2337 = vpop.f32.mrb[0].mxu0
      %v2338 = vadd.f32 %v2165, %v2337
      %v2339 = vpop.f32.mrb[0].mxu0
      %2340 = vdwg.mxu0
      %s2341 = scalar_lea.vmem %s3, 24
      %v2342 = vld [vmem:[%s2341] sm:$0xf]
      %v2343 = vld [vmem:[%s2341 + $0x4] sm:$0xf]
      %v2344 = vld [vmem:[%s2341 + $0x8] sm:$0xf]
      %v2348 = vunpack.c.l.b16 %v2342
      %v2349 = vunpack.c.l.b16 %v2343
      %v2350 = vunpack.c.l.b16 %v2344
      %v2351 = vpack.c.b16 %v2349, %v2348
      %v2352 = vpack.c.b16 %v2350, %v2350
      %v2355 = vsel %vm823, %v2352, 0
      %2357 = vmatprep.subr.bf16.mxu0 0
      %2358 = vmatpush1.bf16.msra.mxu0 %v2351
      %2359 = vmatprep.subr.bf16.mxu0 0
      %2360 = vmatpush1.bf16.msra.mxu0 %v2355
      %2361 = vmatprep.subr.bf16.mxu0 0
      %2362 = vmatpush1.bf16.msra.mxu0 0
      %2363 = vmatprep.subr.bf16.mxu0 0
      %2364 = vmatpush1.bf16.msra.mxu0 0
      %2365 = vmatprep.subr.bf16.mxu0 0
      %2366 = vmatpush1.bf16.msra.mxu0 0
      %2367 = vmatprep.subr.bf16.mxu0 0
      %2368 = vmatpush1.bf16.msra.mxu0 0
      %2369 = vmatprep.subr.bf16.mxu0 0
      %2370 = vmatpush1.bf16.msra.mxu0 0
      %2371 = vmatprep.subr.bf16.mxu0 0
      %2372 = vmatpush1.bf16.msra.mxu0 0
      %2373 = vmatprep.subr.bf16.mxu0 0
      %2374 = vmatpush1.bf16.msra.mxu0 0
      %2375 = vmatprep.subr.bf16.mxu0 0
      %2376 = vmatpush1.bf16.msra.mxu0 0
      %2377 = vmatprep.subr.bf16.mxu0 0
      %2378 = vmatpush1.bf16.msra.mxu0 0
      %2379 = vmatprep.subr.bf16.mxu0 0
      %2380 = vmatpush1.bf16.msra.mxu0 0
      %2381 = vmatprep.subr.bf16.mxu0 0
      %2382 = vmatpush1.bf16.msra.mxu0 0
      %2383 = vmatprep.subr.bf16.mxu0 0
      %2384 = vmatpush1.bf16.msra.mxu0 0
      %2385 = vmatprep.subr.bf16.mxu0 0
      %2386 = vmatpush1.bf16.msra.mxu0 0
      %2387 = vmatprep.subr.bf16.mxu0 0
      %2388 = vmatpush1.bf16.msra.mxu0 0
      %2389 = vmatprep.mubr.bf16.mxu0 0
      %2390 = vmatmul.mubr.bf16.gmra.mrb[0].mxu0 %v1960
      %v2391 = vpop.f32.mrb[0].mxu0
      %v2392 = vadd.f32 0.0, %v2391
      %v2393 = vpop.f32.mrb[0].mxu0
      %v2394 = vpop.f32.mrb[0].mxu0
      %v2395 = vadd.f32 0.0, %v2394
      %v2396 = vpop.f32.mrb[0].mxu0
      %2397 = vmatprep.mubr.bf16.mxu0 0
      %2398 = vmatmul.mubr.bf16.gmra.mrb[0].mxu0 %v1963
      %v2399 = vpop.f32.mrb[0].mxu0
      %v2400 = vadd.f32 0.0, %v2399
      %v2401 = vpop.f32.mrb[0].mxu0
      %v2402 = vpop.f32.mrb[0].mxu0
      %v2403 = vadd.f32 0.0, %v2402
      %v2404 = vpop.f32.mrb[0].mxu0
      %2405 = vmatprep.mubr.bf16.mxu0 0
      %2406 = vmatmul.mubr.bf16.gmra.mrb[0].mxu0 %v1966
      %v2407 = vpop.f32.mrb[0].mxu0
      %v2408 = vadd.f32 0.0, %v2407
      %v2409 = vpop.f32.mrb[0].mxu0
      %v2410 = vpop.f32.mrb[0].mxu0
      %v2411 = vadd.f32 0.0, %v2410
      %v2412 = vpop.f32.mrb[0].mxu0
      %2413 = vmatprep.mubr.bf16.mxu0 0
      %2414 = vmatmul.mubr.bf16.gmra.mrb[0].mxu0 %v1969
      %v2415 = vpop.f32.mrb[0].mxu0
      %v2416 = vadd.f32 0.0, %v2415
      %v2417 = vpop.f32.mrb[0].mxu0
      %v2418 = vpop.f32.mrb[0].mxu0
      %v2419 = vadd.f32 0.0, %v2418
      %v2420 = vpop.f32.mrb[0].mxu0
      %2421 = vmatprep.mubr.bf16.mxu0 0
      %2422 = vmatmul.mubr.bf16.gmra.mrb[0].mxu0 %v1972
      %v2423 = vpop.f32.mrb[0].mxu0
      %v2424 = vadd.f32 0.0, %v2423
      %v2425 = vpop.f32.mrb[0].mxu0
      %v2426 = vpop.f32.mrb[0].mxu0
      %v2427 = vadd.f32 0.0, %v2426
      %v2428 = vpop.f32.mrb[0].mxu0
      %2429 = vmatprep.mubr.bf16.mxu0 0
      %2430 = vmatmul.mubr.bf16.gmra.mrb[0].mxu0 %v1975
      %v2431 = vpop.f32.mrb[0].mxu0
      %v2432 = vadd.f32 0.0, %v2431
      %v2433 = vpop.f32.mrb[0].mxu0
      %v2434 = vpop.f32.mrb[0].mxu0
      %v2435 = vadd.f32 0.0, %v2434
      %v2436 = vpop.f32.mrb[0].mxu0
      %2437 = vmatprep.mubr.bf16.mxu0 0
      %2438 = vmatmul.mubr.bf16.gmra.mrb[0].mxu0 %v1978
      %v2439 = vpop.f32.mrb[0].mxu0
      %v2440 = vadd.f32 0.0, %v2439
      %v2441 = vpop.f32.mrb[0].mxu0
      %v2442 = vpop.f32.mrb[0].mxu0
      %v2443 = vadd.f32 0.0, %v2442
      %v2444 = vpop.f32.mrb[0].mxu0
      %2445 = vmatprep.mubr.bf16.mxu0 0
      %2446 = vmatmul.mubr.bf16.gmra.mrb[0].mxu0 %v1981
      %v2447 = vpop.f32.mrb[0].mxu0
      %v2448 = vadd.f32 0.0, %v2447
      %v2449 = vpop.f32.mrb[0].mxu0
      %v2450 = vpop.f32.mrb[0].mxu0
      %v2451 = vadd.f32 0.0, %v2450
      %v2452 = vpop.f32.mrb[0].mxu0
      %2453 = vmatprep.mubr.bf16.mxu0 0
      %2454 = vmatmul.mubr.bf16.gmra.mrb[0].mxu0 %v1984
      %v2455 = vpop.f32.mrb[0].mxu0
      %v2456 = vadd.f32 0.0, %v2455
      %v2457 = vpop.f32.mrb[0].mxu0
      %v2458 = vpop.f32.mrb[0].mxu0
      %v2459 = vadd.f32 0.0, %v2458
      %v2460 = vpop.f32.mrb[0].mxu0
      %2461 = vmatprep.mubr.bf16.mxu0 0
      %2462 = vmatmul.mubr.bf16.gmra.mrb[0].mxu0 %v1987
      %v2463 = vpop.f32.mrb[0].mxu0
      %v2464 = vadd.f32 0.0, %v2463
      %v2465 = vpop.f32.mrb[0].mxu0
      %v2466 = vpop.f32.mrb[0].mxu0
      %v2467 = vadd.f32 0.0, %v2466
      %v2468 = vpop.f32.mrb[0].mxu0
      %2469 = vmatprep.mubr.bf16.mxu0 0
      %2470 = vmatmul.mubr.bf16.gmra.mrb[0].mxu0 %v1990
      %v2471 = vpop.f32.mrb[0].mxu0
      %v2472 = vadd.f32 0.0, %v2471
      %v2473 = vpop.f32.mrb[0].mxu0
      %v2474 = vpop.f32.mrb[0].mxu0
      %v2475 = vadd.f32 0.0, %v2474
      %v2476 = vpop.f32.mrb[0].mxu0
      %2477 = vmatprep.mubr.bf16.mxu0 0
      %2478 = vmatmul.mubr.bf16.gmra.mrb[0].mxu0 %v1993
      %v2479 = vpop.f32.mrb[0].mxu0
      %v2480 = vadd.f32 0.0, %v2479
      %v2481 = vpop.f32.mrb[0].mxu0
      %v2482 = vpop.f32.mrb[0].mxu0
      %v2483 = vadd.f32 0.0, %v2482
      %v2484 = vpop.f32.mrb[0].mxu0
      %2485 = vmatprep.mubr.bf16.mxu0 0
      %2486 = vmatmul.mubr.bf16.gmra.mrb[0].mxu0 %v1996
      %v2487 = vpop.f32.mrb[0].mxu0
      %v2488 = vadd.f32 0.0, %v2487
      %v2489 = vpop.f32.mrb[0].mxu0
      %v2490 = vpop.f32.mrb[0].mxu0
      %v2491 = vadd.f32 0.0, %v2490
      %v2492 = vpop.f32.mrb[0].mxu0
      %2493 = vmatprep.mubr.bf16.mxu0 0
      %2494 = vmatmul.mubr.bf16.gmra.mrb[0].mxu0 %v1999
      %v2495 = vpop.f32.mrb[0].mxu0
      %v2496 = vadd.f32 0.0, %v2495
      %v2497 = vpop.f32.mrb[0].mxu0
      %v2498 = vpop.f32.mrb[0].mxu0
      %v2499 = vadd.f32 0.0, %v2498
      %v2500 = vpop.f32.mrb[0].mxu0
      %2501 = vmatprep.mubr.bf16.mxu0 0
      %2502 = vmatmul.mubr.bf16.gmra.mrb[0].mxu0 %v2002
      %v2503 = vpop.f32.mrb[0].mxu0
      %v2504 = vadd.f32 0.0, %v2503
      %v2505 = vpop.f32.mrb[0].mxu0
      %v2506 = vpop.f32.mrb[0].mxu0
      %v2507 = vadd.f32 0.0, %v2506
      %v2508 = vpop.f32.mrb[0].mxu0
      %2509 = vmatprep.mubr.bf16.mxu0 0
      %2510 = vmatmul.mubr.bf16.gmra.mrb[0].mxu0 %v998
      %v2511 = vpop.f32.mrb[0].mxu0
      %v2512 = vadd.f32 0.0, %v2511
      %v2513 = vpop.f32.mrb[0].mxu0
      %v2514 = vpop.f32.mrb[0].mxu0
      %v2515 = vadd.f32 0.0, %v2514
      %v2516 = vpop.f32.mrb[0].mxu0
      %2517 = vdwg.mxu0
      %v2518 = vadd.f32 %v2215, %v2392
      %v2519 = vadd.f32 %v2218, %v2395
      %v2520 = vadd.f32 %v2223, %v2400
      %v2521 = vadd.f32 %v2226, %v2403
      %v2522 = vadd.f32 %v2231, %v2408
      %v2523 = vadd.f32 %v2234, %v2411
      %v2524 = vadd.f32 %v2239, %v2416
      %v2525 = vadd.f32 %v2242, %v2419
      %v2526 = vadd.f32 %v2247, %v2424
      %v2527 = vadd.f32 %v2250, %v2427
      %v2528 = vadd.f32 %v2255, %v2432
      %v2529 = vadd.f32 %v2258, %v2435
      %v2530 = vadd.f32 %v2263, %v2440
      %v2531 = vadd.f32 %v2266, %v2443
      %v2532 = vadd.f32 %v2271, %v2448
      %v2533 = vadd.f32 %v2274, %v2451
      %v2534 = vadd.f32 %v2279, %v2456
      %v2535 = vadd.f32 %v2282, %v2459
      %v2536 = vadd.f32 %v2287, %v2464
      %v2537 = vadd.f32 %v2290, %v2467
      %v2538 = vadd.f32 %v2295, %v2472
      %v2539 = vadd.f32 %v2298, %v2475
      %v2540 = vadd.f32 %v2303, %v2480
      %v2541 = vadd.f32 %v2306, %v2483
      %v2542 = vadd.f32 %v2311, %v2488
      %v2543 = vadd.f32 %v2314, %v2491
      %v2544 = vadd.f32 %v2319, %v2496
      %v2545 = vadd.f32 %v2322, %v2499
      %v2546 = vadd.f32 %v2327, %v2504
      %v2547 = vadd.f32 %v2330, %v2507
      %v2548 = vadd.f32 %v2335, %v2512
      %v2549 = vadd.f32 %v2338, %v2515
      %v2550 = vld [vmem:[%s4] sm:$0x1]
      %v2552 = vlaneseq
      %v2553 = vshrl.u32 %v2552, 7
      %v2554 = vsub.s32 0, %v2553
      %v2555 = vrot.slane %v2550, %v2554
      %v2557 = vadd.f32 %v2518, %v2555
      %v2558 = vadd.f32 %v2519, %v2555
      %v2559 = vadd.f32 %v2520, %v2555
      %v2560 = vadd.f32 %v2521, %v2555
      %v2561 = vadd.f32 %v2522, %v2555
      %v2562 = vadd.f32 %v2523, %v2555
      %v2563 = vadd.f32 %v2524, %v2555
      %v2564 = vadd.f32 %v2525, %v2555
      %v2565 = vadd.f32 %v2526, %v2555
      %v2566 = vadd.f32 %v2527, %v2555
      %v2567 = vadd.f32 %v2528, %v2555
      %v2568 = vadd.f32 %v2529, %v2555
      %v2569 = vadd.f32 %v2530, %v2555
      %v2570 = vadd.f32 %v2531, %v2555
      %v2571 = vadd.f32 %v2532, %v2555
      %v2572 = vadd.f32 %v2533, %v2555
      %v2573 = vadd.f32 %v2534, %v2555
      %v2574 = vadd.f32 %v2535, %v2555
      %v2575 = vadd.f32 %v2536, %v2555
      %v2576 = vadd.f32 %v2537, %v2555
      %v2577 = vadd.f32 %v2538, %v2555
      %v2578 = vadd.f32 %v2539, %v2555
      %v2579 = vadd.f32 %v2540, %v2555
      %v2580 = vadd.f32 %v2541, %v2555
      %v2581 = vadd.f32 %v2542, %v2555
      %v2582 = vadd.f32 %v2543, %v2555
      %v2583 = vadd.f32 %v2544, %v2555
      %v2584 = vadd.f32 %v2545, %v2555
      %v2585 = vadd.f32 %v2546, %v2555
      %v2586 = vadd.f32 %v2547, %v2555
      %v2587 = vadd.f32 %v2548, %v2555
      %v2588 = vadd.f32 %v2549, %v2555
      %v2589 = vadd.f32 %v2557, %v226
      %v2590 = vadd.f32 %v2558, %v227
      %v2591 = vadd.f32 %v2559, %v228
      %v2592 = vadd.f32 %v2560, %v229
      %v2593 = vadd.f32 %v2561, %v230
      %v2594 = vadd.f32 %v2562, %v231
      %v2595 = vadd.f32 %v2563, %v232
      %v2596 = vadd.f32 %v2564, %v233
      %v2597 = vadd.f32 %v2565, %v234
      %v2598 = vadd.f32 %v2566, %v235
      %v2599 = vadd.f32 %v2567, %v236
      %v2600 = vadd.f32 %v2568, %v237
      %v2601 = vadd.f32 %v2569, %v238
      %v2602 = vadd.f32 %v2570, %v239
      %v2603 = vadd.f32 %v2571, %v240
      %v2604 = vadd.f32 %v2572, %v241
      %v2605 = vadd.f32 %v2573, %v242
      %v2606 = vadd.f32 %v2574, %v243
      %v2607 = vadd.f32 %v2575, %v244
      %v2608 = vadd.f32 %v2576, %v245
      %v2609 = vadd.f32 %v2577, %v246
      %v2610 = vadd.f32 %v2578, %v247
      %v2611 = vadd.f32 %v2579, %v248
      %v2612 = vadd.f32 %v2580, %v249
      %v2613 = vadd.f32 %v2581, %v250
      %v2614 = vadd.f32 %v2582, %v251
      %v2615 = vadd.f32 %v2583, %v252
      %v2616 = vadd.f32 %v2584, %v253
      %v2617 = vadd.f32 %v2585, %v254
      %v2618 = vadd.f32 %v2586, %v255
      %v2619 = vadd.f32 %v2587, %v256
      %v2620 = vadd.f32 %v2588, %v257
      %v2621 = vmax.f32 %v2589, 0.0
      %v2622 = vmax.f32 %v2590, 0.0
      %v2623 = vmax.f32 %v2591, 0.0
      %v2624 = vmax.f32 %v2592, 0.0
      %v2625 = vmax.f32 %v2593, 0.0
      %v2626 = vmax.f32 %v2594, 0.0
      %v2627 = vmax.f32 %v2595, 0.0
      %v2628 = vmax.f32 %v2596, 0.0
      %v2629 = vmax.f32 %v2597, 0.0
      %v2630 = vmax.f32 %v2598, 0.0
      %v2631 = vmax.f32 %v2599, 0.0
      %v2632 = vmax.f32 %v2600, 0.0
      %v2633 = vmax.f32 %v2601, 0.0
      %v2634 = vmax.f32 %v2602, 0.0
      %v2635 = vmax.f32 %v2603, 0.0
      %v2636 = vmax.f32 %v2604, 0.0
      %v2637 = vmax.f32 %v2605, 0.0
      %v2638 = vmax.f32 %v2606, 0.0
      %v2639 = vmax.f32 %v2607, 0.0
      %v2640 = vmax.f32 %v2608, 0.0
      %v2641 = vmax.f32 %v2609, 0.0
      %v2642 = vmax.f32 %v2610, 0.0
      %v2643 = vmax.f32 %v2611, 0.0
      %v2644 = vmax.f32 %v2612, 0.0
      %v2645 = vmax.f32 %v2613, 0.0
      %v2646 = vmax.f32 %v2614, 0.0
      %v2647 = vmax.f32 %v2615, 0.0
      %v2648 = vmax.f32 %v2616, 0.0
      %v2649 = vmax.f32 %v2617, 0.0
      %v2650 = vmax.f32 %v2618, 0.0
      %v2651 = vmax.f32 %v2619, 0.0
      %v2652 = vmax.f32 %v2620, 0.0
      %2653 = vst.msk [vmem:[%s224] sm:$0xff] %vm676, %v2621
      %2654 = vst.msk [vmem:[%s224 + $0x8] sm:$0xff] %vm676, %v2622
      %2655 = vst.msk [vmem:[%s224 + $0x10] sm:$0xff] %vm676, %v2623
      %2656 = vst.msk [vmem:[%s224 + $0x18] sm:$0xff] %vm676, %v2624
      %2657 = vst.msk [vmem:[%s224 + $0x20] sm:$0xff] %vm676, %v2625
      %2658 = vst.msk [vmem:[%s224 + $0x28] sm:$0xff] %vm676, %v2626
      %2659 = vst.msk [vmem:[%s224 + $0x30] sm:$0xff] %vm676, %v2627
      %2660 = vst.msk [vmem:[%s224 + $0x38] sm:$0xff] %vm676, %v2628
      %2661 = vst.msk [vmem:[%s224 + $0x40] sm:$0xff] %vm676, %v2629
      %2662 = vst.msk [vmem:[%s224 + $0x48] sm:$0xff] %vm676, %v2630
      %2663 = vst.msk [vmem:[%s224 + $0x50] sm:$0xff] %vm676, %v2631
      %2664 = vst.msk [vmem:[%s224 + $0x58] sm:$0xff] %vm676, %v2632
      %2665 = vst.msk [vmem:[%s224 + $0x60] sm:$0xff] %vm676, %v2633
      %2666 = vst.msk [vmem:[%s224 + $0x68] sm:$0xff] %vm676, %v2634
      %2667 = vst.msk [vmem:[%s224 + $0x70] sm:$0xff] %vm676, %v2635
      %2668 = vst.msk [vmem:[%s224 + $0x78] sm:$0xff] %vm676, %v2636
      %2669 = vst.msk [vmem:[%s224 + $0x80] sm:$0xff] %vm676, %v2637
      %2670 = vst.msk [vmem:[%s224 + $0x88] sm:$0xff] %vm676, %v2638
      %2671 = vst.msk [vmem:[%s224 + $0x90] sm:$0xff] %vm676, %v2639
      %2672 = vst.msk [vmem:[%s224 + $0x98] sm:$0xff] %vm676, %v2640
      %2673 = vst.msk [vmem:[%s224 + $0xa0] sm:$0xff] %vm676, %v2641
      %2674 = vst.msk [vmem:[%s224 + $0xa8] sm:$0xff] %vm676, %v2642
      %2675 = vst.msk [vmem:[%s224 + $0xb0] sm:$0xff] %vm676, %v2643
      %2676 = vst.msk [vmem:[%s224 + $0xb8] sm:$0xff] %vm676, %v2644
      %2677 = vst.msk [vmem:[%s224 + $0xc0] sm:$0xff] %vm676, %v2645
      %2678 = vst.msk [vmem:[%s224 + $0xc8] sm:$0xff] %vm676, %v2646
      %2679 = vst.msk [vmem:[%s224 + $0xd0] sm:$0xff] %vm676, %v2647
      %2680 = vst.msk [vmem:[%s224 + $0xd8] sm:$0xff] %vm676, %v2648
      %2681 = vst.msk [vmem:[%s224 + $0xe0] sm:$0xff] %vm676, %v2649
      %2682 = vst.msk [vmem:[%s224 + $0xe8] sm:$0xff] %vm676, %v2650
      %2683 = vst.msk [vmem:[%s224 + $0xf0] sm:$0xff] %vm676, %v2651
      %2684 = vst.msk [vmem:[%s224 + $0xf8] sm:$0xff] %vm676, %v2652
      %p2685 = scmp.lt.s32.totalorder %s16, 1
      %s2686 = scalar_select %p2685, %s16, 1
      %s2687 = smul.addr %s2686, 32
      %s2688 = smul.addr %s2687, 8
      %s2689 = scalar_lea.vmem %s5, %s2688
      // Predicated region
      $region41: #{tpu_custom_call.1} parent=39 // pred_check
        %p2690 = pneg %p144
      $region42: #{tpu_custom_call.1} parent=39 // pred_check_branch
        %2692 = sbr.rel (%p2690) target = $region44
      $region43: #{tpu_custom_call.1} parent=39 // pred_region
        _
      $region44: #{tpu_custom_call.1} parent=39 // pred_fallthru
        _
    $region40: #{tpu_custom_call.1} parent=5 // pred_fallthru
      _
    %p2693 = scmp.le.s32.totalorder 2, %s11
    // Predicated region
    $region45: #{tpu_custom_call.1} parent=5 // pred_check
      %p2694 = pneg %p2693
    $region46: #{tpu_custom_call.1} parent=5 // pred_check_branch
      %2696 = sbr.rel (%p2694) target = $region48
    $region47: #{tpu_custom_call.1} parent=5 // pred_region
      %s2697 = ssub.s32 %s11, 2
      // Predicated region
      $region49: #{tpu_custom_call.1} parent=47 // pred_check
        %p2698 = pneg %p150
      $region50: #{tpu_custom_call.1} parent=47 // pred_check_branch
        %2700 = sbr.rel (%p2698) target = $region52
      $region51: #{tpu_custom_call.1} parent=47 // pred_region
        %p2701 = scmp.lt.s32.totalorder %s17, 1
        %s2702 = scalar_select %p2701, %s17, 1
        %s2703 = smul.addr %s2702, 32
        %s2704 = smul.addr %s2703, 8
        %s2705 = scalar_lea.vmem %s5, %s2704
      $region52: #{tpu_custom_call.1} parent=47 // pred_fallthru
        _
    $region48: #{tpu_custom_call.1} parent=5 // pred_fallthru
      _
  $region6: #{tpu_custom_call.1} parent=0 // loop_footer
    %s15 = sadd.s32 1, %s11
  $region7: #{tpu_custom_call.1} parent=0 // loop_footer_branch
    %10 = sbr.rel target = $region3
  $region8: #{tpu_custom_call.1} parent=0 // loop_exit
    _

</llo_original>
